<compile_context>
chip_gen: v6e
topology: v6e:2x2x1
jax: 0.10.0
libtpu: 0.0.40
codegen_flags: <defaults>
</compile_context>

<pallas_src>
import math

import numpy as np
import jax
import jax.numpy as jnp
from jax.experimental import pallas as pl
from jax.experimental.pallas import tpu as pltpu

BN_EPS = 1e-5  # PyTorch BatchNorm2d default eps; fresh module => gamma=1, beta=0


# --------------------------------------------------------------------------- #
# tiling / compiler-parameter helpers
# --------------------------------------------------------------------------- #
def _vmem_limit_bytes():
    """~75% of physical VMEM, capped at 96 MiB.

    v5e/v6e (128 MiB physical) -> 96 MiB; v7x (64 MiB per TC) -> 48 MiB."""
    cap = 64 * 1024 * 1024
    try:
        cap = int(pltpu.get_tpu_info().vmem_capacity_bytes)
    except Exception:
        pass
    return min(96 * 1024 * 1024, (cap * 3) // 4)


def _compiler_params():
    return pltpu.CompilerParams(
        # every pass is embarrassingly parallel over row tiles (stats are
        # per-tile partials reduced outside), so v7x can use both TCs.
        dimension_semantics=("parallel",),
        vmem_limit_bytes=_vmem_limit_bytes(),
    )


def _choose_tiling(m, max_tile, min_tiles=8):
    """Row tiling for a streaming [m, D] pass.

    Returns (tile_m, n_tiles, m_pad).  tile_m is a multiple of 8 (or m itself
    when m is tiny), n_tiles >= min_tiles whenever m allows it (keeps both v7x
    TensorCores busy with >=2 double-buffered steps each), and
    m_pad = n_tiles * tile_m (inputs are zero-padded to m_pad when no exact
    divisor exists -- padded rows are masked out of the h2 statistics)."""
    if m <= 16:
        return m, 1, m
    cap = min(max_tile, max(8, -(-m // min_tiles)))
    cap -= cap % 8
    cap = max(cap, 8)
    for cand in range(cap, 7, -8):          # prefer an exact divisor: no padding
        if m % cand == 0:
            return cand, m // cand, m
    n_tiles = -(-m // cap)
    return cap, n_tiles, n_tiles * cap


def _maybe_pad_rows(x2d, m_pad):
    m = x2d.shape[0]
    if m_pad == m:
        return x2d
    return jnp.pad(x2d, ((0, m_pad - m), (0, 0)))


def _bn_mean_inv(s, ss, count):
    mean = s / count
    var = jnp.maximum(ss / count - mean * mean, 0.0)   # biased batch variance
    return mean, jax.lax.rsqrt(var + BN_EPS)


# --------------------------------------------------------------------------- #
# FAST PATH kernels (HS is HT => gate is a no-op, h == HS)
# --------------------------------------------------------------------------- #
def _fast_h1_stats_kernel(x_ref, w1_ref, stats_ref):
    h1 = jnp.dot(x_ref[...], w1_ref[...], preferred_element_type=jnp.float32)
    # zero-padded rows contribute exactly zero here, no masking needed
    stats_ref[...] = jnp.concatenate(
        [jnp.sum(h1, axis=0, keepdims=True),
         jnp.sum(h1 * h1, axis=0, keepdims=True)], axis=0)


def _make_fast_h2_stats_kernel(m_true, tile_m, masked):
    def kernel(x_ref, w1_ref, w2_ref, bn1_ref, stats_ref):
        h1 = jnp.dot(x_ref[...], w1_ref[...], preferred_element_type=jnp.float32)
        h1 = jnp.maximum((h1 - bn1_ref[0:1, :]) * bn1_ref[1:2, :], 0.0)
        h2 = jnp.dot(h1, w2_ref[...], preferred_element_type=jnp.float32)
        if masked:
            # BN+ReLU of a zero (padded) row is non-zero -> mask before stats
            i = pl.program_id(0)
            row = jax.lax.broadcasted_iota(jnp.int32, h2.shape, 0)
            h2 = jnp.where(row < (m_true - i * tile_m), h2, 0.0)
        stats_ref[...] = jnp.concatenate(
            [jnp.sum(h2, axis=0, keepdims=True),
             jnp.sum(h2 * h2, axis=0, keepdims=True)], axis=0)
    return kernel


def _fast_out_kernel(x_ref, w1_ref, w2_ref, bn1_ref, bn2_ref, out_ref):
    h1 = jnp.dot(x_ref[...], w1_ref[...], preferred_element_type=jnp.float32)
    h1 = jnp.maximum((h1 - bn1_ref[0:1, :]) * bn1_ref[1:2, :], 0.0)
    h2 = jnp.dot(h1, w2_ref[...], preferred_element_type=jnp.float32)
    out_ref[...] = ((h2 - bn2_ref[0:1, :]) * bn2_ref[1:2, :]).astype(out_ref.dtype)


# --------------------------------------------------------------------------- #
# GENERAL PATH kernels (HS != HT)
# --------------------------------------------------------------------------- #
def _proj_stats_kernel(hs_ref, ht_ref, wxs_ref, wxt_ref, stats_ref):
    xs = jnp.dot(hs_ref[...], wxs_ref[...], preferred_element_type=jnp.float32)
    xt = jnp.dot(ht_ref[...], wxt_ref[...], preferred_element_type=jnp.float32)
    stats_ref[...] = jnp.concatenate(
        [jnp.sum(xs, axis=0, keepdims=True),
         jnp.sum(xs * xs, axis=0, keepdims=True),
         jnp.sum(xt, axis=0, keepdims=True),
         jnp.sum(xt * xt, axis=0, keepdims=True)], axis=0)


def _gate_fc1_kernel(hs_ref, ht_ref, wxs_ref, wxt_ref, w1_ref, bn_ref,
                     h1_ref, stats_ref):
    hs = hs_ref[...]
    ht = ht_ref[...]
    # recompute the cheap D x D projections instead of storing/reloading them
    xs = jnp.dot(hs, wxs_ref[...], preferred_element_type=jnp.float32)
    xt = jnp.dot(ht, wxt_ref[...], preferred_element_type=jnp.float32)
    # bn_ref rows: [mean_xs, inv_xs, mean_xt, inv_xt]
    xs = (xs - bn_ref[0:1, :]) * bn_ref[1:2, :]
    xt = (xt - bn_ref[2:3, :]) * bn_ref[3:4, :]
    z = jax.nn.sigmoid(xs + xt)             # exp + recip land on the EUP
    h = ht + z * (hs - ht)                  # == z*hs + (1-z)*ht, fewer VALU ops
    h1 = jnp.dot(h, w1_ref[...], preferred_element_type=jnp.float32)
    h1_ref[...] = h1
    stats_ref[...] = jnp.concatenate(
        [jnp.sum(h1, axis=0, keepdims=True),
         jnp.sum(h1 * h1, axis=0, keepdims=True)], axis=0)


def _make_h2_stats_kernel(m_true, tile_m, masked):
    def kernel(h1_ref, w2_ref, bn_ref, stats_ref):
        h1 = jnp.maximum((h1_ref[...] - bn_ref[0:1, :]) * bn_ref[1:2, :], 0.0)
        h2 = jnp.dot(h1, w2_ref[...], preferred_element_type=jnp.float32)
        if masked:
            i = pl.program_id(0)
            row = jax.lax.broadcasted_iota(jnp.int32, h2.shape, 0)
            h2 = jnp.where(row < (m_true - i * tile_m), h2, 0.0)
        stats_ref[...] = jnp.concatenate(
            [jnp.sum(h2, axis=0, keepdims=True),
             jnp.sum(h2 * h2, axis=0, keepdims=True)], axis=0)
    return kernel


def _final_out_kernel(h1_ref, w2_ref, bn2_ref, bn3_ref, out_ref):
    h1 = jnp.maximum((h1_ref[...] - bn2_ref[0:1, :]) * bn2_ref[1:2, :], 0.0)
    h2 = jnp.dot(h1, w2_ref[...], preferred_element_type=jnp.float32)
    out_ref[...] = ((h2 - bn3_ref[0:1, :]) * bn3_ref[1:2, :]).astype(out_ref.dtype)


# --------------------------------------------------------------------------- #
# drivers
# --------------------------------------------------------------------------- #
def _fast_path(x2, w1, w2, m_true, tile_m, n_tiles, m_pad, cparams):
    D = x2.shape[1]
    xp = _maybe_pad_rows(x2, m_pad)
    row_spec = pl.BlockSpec((tile_m, D), lambda i: (i, 0))
    w_spec = pl.BlockSpec((D, D), lambda i: (0, 0))      # weights stay resident
    bn_spec = pl.BlockSpec((2, D), lambda i: (0, 0))
    st_spec = pl.BlockSpec((None, 2, D), lambda i: (i, 0, 0))
    count = jnp.float32(m_true)
    masked = m_pad != m_true

    # pass 1: BN statistics of h1 = X @ W1 (h1 not stored)
    stats1 = pl.pallas_call(
        _fast_h1_stats_kernel,
        grid=(n_tiles,),
        in_specs=[row_spec, w_spec],
        out_specs=st_spec,
        out_shape=jax.ShapeDtypeStruct((n_tiles, 2, D), jnp.float32),
        compiler_params=cparams,
    )(xp, w1)
    s = jnp.sum(stats1, axis=0)
    m1, i1 = _bn_mean_inv(s[0], s[1], count)
    bn1 = jnp.stack([m1, i1], axis=0)

    # pass 2: BN statistics of h2 = ReLU(BN(h1)) @ W2 (h2 not stored)
    stats2 = pl.pallas_call(
        _make_fast_h2_stats_kernel(m_true, tile_m, masked),
        grid=(n_tiles,),
        in_specs=[row_spec, w_spec, w_spec, bn_spec],
        out_specs=st_spec,
        out_shape=jax.ShapeDtypeStruct((n_tiles, 2, D), jnp.float32),
        compiler_params=cparams,
    )(xp, w1, w2, bn1)
    s = jnp.sum(stats2, axis=0)
    m2, i2 = _bn_mean_inv(s[0], s[1], count)
    bn2 = jnp.stack([m2, i2], axis=0)

    # pass 3: recompute h2 and apply the final BN directly into the output
    out = pl.pallas_call(
        _fast_out_kernel,
        grid=(n_tiles,),
        in_specs=[row_spec, w_spec, w_spec, bn_spec, bn_spec],
        out_specs=row_spec,
        out_shape=jax.ShapeDtypeStruct((m_pad, D), jnp.float32),
        compiler_params=cparams,
    )(xp, w1, w2, bn1, bn2)
    if masked:
        out = out[:m_true]
    return out


def _general_path(hs2, ht2, params, m_true, tile_m, n_tiles, m_pad, cparams):
    D = hs2.shape[1]
    hsp = _maybe_pad_rows(hs2, m_pad)
    htp = _maybe_pad_rows(ht2, m_pad)
    wxs, wxt = params["wxs_t"], params["wxt_t"]
    w1, w2 = params["w1_t"], params["w2_t"]

    row_spec = pl.BlockSpec((tile_m, D), lambda i: (i, 0))
    w_spec = pl.BlockSpec((D, D), lambda i: (0, 0))
    bn2_spec = pl.BlockSpec((2, D), lambda i: (0, 0))
    bn4_spec = pl.BlockSpec((4, D), lambda i: (0, 0))
    st2_spec = pl.BlockSpec((None, 2, D), lambda i: (i, 0, 0))
    st4_spec = pl.BlockSpec((None, 4, D), lambda i: (i, 0, 0))
    count = jnp.float32(m_true)
    masked = m_pad != m_true

    # pass 1: BN statistics of the two projections
    stats1 = pl.pallas_call(
        _proj_stats_kernel,
        grid=(n_tiles,),
        in_specs=[row_spec, row_spec, w_spec, w_spec],
        out_specs=st4_spec,
        out_shape=jax.ShapeDtypeStruct((n_tiles, 4, D), jnp.float32),
        compiler_params=cparams,
    )(hsp, htp, wxs, wxt)
    s1 = jnp.sum(stats1, axis=0)
    m_xs, i_xs = _bn_mean_inv(s1[0], s1[1], count)
    m_xt, i_xt = _bn_mean_inv(s1[2], s1[3], count)
    bn1 = jnp.stack([m_xs, i_xs, m_xt, i_xt], axis=0)        # (4, D)

    # pass 2: gate + FC_h layer 1 (h1 stored once) + its stats
    h1_raw, stats2 = pl.pallas_call(
        _gate_fc1_kernel,
        grid=(n_tiles,),
        in_specs=[row_spec, row_spec, w_spec, w_spec, w_spec, bn4_spec],
        out_specs=(row_spec, st2_spec),
        out_shape=(jax.ShapeDtypeStruct((m_pad, D), jnp.float32),
                   jax.ShapeDtypeStruct((n_tiles, 2, D), jnp.float32)),
        compiler_params=cparams,
    )(hsp, htp, wxs, wxt, w1, bn1)
    s2 = jnp.sum(stats2, axis=0)
    m2, i2 = _bn_mean_inv(s2[0], s2[1], count)
    bn2 = jnp.stack([m2, i2], axis=0)                        # (2, D)

    # pass 3: stats of h2 = ReLU(BN(h1)) @ W2 (h2 NOT stored -- no round trip)
    stats3 = pl.pallas_call(
        _make_h2_stats_kernel(m_true, tile_m, masked),
        grid=(n_tiles,),
        in_specs=[row_spec, w_spec, bn2_spec],
        out_specs=st2_spec,
        out_shape=jax.ShapeDtypeStruct((n_tiles, 2, D), jnp.float32),
        compiler_params=cparams,
    )(h1_raw, w2, bn2)
    s3 = jnp.sum(stats3, axis=0)
    m3, i3 = _bn_mean_inv(s3[0], s3[1], count)
    bn3 = jnp.stack([m3, i3], axis=0)

    # pass 4: recompute h2 and apply final BN directly into the output
    out = pl.pallas_call(
        _final_out_kernel,
        grid=(n_tiles,),
        in_specs=[row_spec, w_spec, bn2_spec, bn2_spec],
        out_specs=row_spec,
        out_shape=jax.ShapeDtypeStruct((m_pad, D), jnp.float32),
        compiler_params=cparams,
    )(h1_raw, w2, bn2, bn3)
    if masked:
        out = out[:m_true]
    return out


def gated_fusion_pallas(hs, ht, params, max_tile_rows=32768):
    """hs, ht: [B, T, N, D] float32. Returns [B, T, N, D] float32."""
    B, T, N, D = hs.shape
    M = B * T * N
    cparams = _compiler_params()

    if hs is ht:
        # shipped STLayer path: the gate is exactly a no-op (h == hs), and the
        # identical operand is never DMA'd twice.
        hs2 = hs.reshape(M, D).astype(jnp.float32)
        tile_m, n_tiles, m_pad = _choose_tiling(M, max_tile_rows, min_tiles=8)
        out2 = _fast_path(hs2, params["w1_t"], params["w2_t"],
                          M, tile_m, n_tiles, m_pad, cparams)
    else:
        hs2 = hs.reshape(M, D).astype(jnp.float32)
        ht2 = ht.reshape(M, D).astype(jnp.float32)
        # 3 concurrent streams in pass 2 -> halve the row tile vs the fast path
        tile_m, n_tiles, m_pad = _choose_tiling(
            M, max(8, max_tile_rows // 2), min_tiles=8)
        out2 = _general_path(hs2, ht2, params, M, tile_m, n_tiles, m_pad, cparams)

    return out2.reshape(B, T, N, D)


# --------------------------------------------------------------------------- #
# parameters / module-level forward
# --------------------------------------------------------------------------- #
def init_params(key, D):
    """Deterministic xavier_uniform weights (as the module does).

    Conv biases (FC_xt, FC_h) are omitted: they are zero-initialized by the
    module AND a per-channel constant added right before a BatchNorm with
    identity affine is exactly cancelled by the mean subtraction."""
    def xavier(k, fan_in, fan_out):
        bound = math.sqrt(6.0 / (fan_in + fan_out))
        # PyTorch conv weight is [out, in, 1, 1]; store its transpose [in, out]
        # so the kernel computes x @ W^T as jnp.dot(x, Wt).
        w = jax.random.uniform(k, (fan_out, fan_in), jnp.float32, -bound, bound)
        return jnp.transpose(w)

    k = jax.random.split(key, 4)
    return {
        "wxs_t": xavier(k[0], D, D),   # FC_xs (no bias)
        "wxt_t": xavier(k[1], D, D),   # FC_xt
        "w1_t":  xavier(k[2], D, D),   # FC_h layer 1
        "w2_t":  xavier(k[3], D, D),   # FC_h layer 2
    }


def st_layer_forward(X, adj, in_degree, out_degree, params, max_tile_rows=32768):
    """STLayer.forward.  Temporal/Spatial blocks are identity (see TODO above),
    so HT = HS = X and the output is gatedFusion(HS, HT)."""
    del adj, in_degree, out_degree  # used only by the (unavailable) spatial block
    HT = X
    HS = X
    return gated_fusion_pallas(HS, HT, params, max_tile_rows=max_tile_rows)


def _gated_fusion_reference(hs, ht, params):
    """Pure-jnp reference (training-mode BN, identity affine)."""
    B, T, N, D = hs.shape
    hs2 = hs.reshape(-1, D).astype(jnp.float32)
    ht2 = ht.reshape(-1, D).astype(jnp.float32)

    def bn(x):
        m = jnp.mean(x, axis=0, keepdims=True)
        v = jnp.mean((x - m) ** 2, axis=0, keepdims=True)
        return (x - m) / jnp.sqrt(v + BN_EPS)

    xs = bn(hs2 @ params["wxs_t"])
    xt = bn(ht2 @ params["wxt_t"])
    z = jax.nn.sigmoid(xs + xt)
    h = z * hs2 + (1.0 - z) * ht2
    h1 = jax.nn.relu(bn(h @ params["w1_t"]))
    h2 = bn(h1 @ params["w2_t"])
    return h2.reshape(B, T, N, D)


if __name__ == "__main__":
    B, T, N, D = 2, 8, 16, 32  # batch, num_step, num_vertex, d_model

    key = jax.random.PRNGKey(0)
    kx, kt, kp = jax.random.split(key, 3)
    X = jax.random.normal(kx, (B, T, N, D), jnp.float32)
    adj = jnp.ones((N, N), jnp.float32) / N
    in_degree = jnp.ones((N,), jnp.int32)
    out_degree = jnp.ones((N,), jnp.int32)

    params = init_params(kp, D)

    # shipped path (HS is HT): fast 3-pass kernel, multi-tile grid (8 tiles)
    fwd = jax.jit(st_layer_forward, static_argnames=("max_tile_rows",))
    out = jax.block_until_ready(fwd(X, adj, in_degree, out_degree, params))
    ref = _gated_fusion_reference(X, X, params)
    assert out.shape == (B, T, N, D)
    np.testing.assert_allclose(np.asarray(out), np.asarray(ref),
                               rtol=1e-4, atol=1e-4)

    # general path (HS != HT): full 4-pass gated fusion
    HT = jax.random.normal(kt, (B, T, N, D), jnp.float32)
    gen = jax.jit(gated_fusion_pallas, static_argnames=("max_tile_rows",))
    out2 = jax.block_until_ready(gen(X, HT, params))
    ref2 = _gated_fusion_reference(X, HT, params)
    np.testing.assert_allclose(np.asarray(out2), np.asarray(ref2),
                               rtol=1e-4, atol=1e-4)

    print("KERNEL_OK")
</pallas_src>

<mosaic_0001>
module attributes {stable_mosaic.version = 11 : i64} {
  func.func @kernel(%arg0: i32, %arg1: memref<32x32xf32, #tpu.memory_space<vmem>>, %arg2: memref<32x32xf32, #tpu.memory_space<vmem>>, %arg3: memref<32x32xf32, #tpu.memory_space<vmem>>, %arg4: memref<2x32xf32, #tpu.memory_space<vmem>>, %arg5: memref<1x2x32xf32, #tpu.memory_space<vmem>>) attributes {dimension_semantics = [#tpu.dimension_semantics<parallel>], iteration_bounds = array<i64: 8>, scalar_prefetch = 0 : i64, scratch_operands = 0 : i64, tpu.core_type = #tpu.core_type<tc>, window_params = [{transform_indices = @transform_0, window_bounds = array<i64: 32, 32>}, {pipeline_mode = #tpu.pipeline_mode<synchronous>, transform_indices = @transform_1, window_bounds = array<i64: 32, 32>}, {pipeline_mode = #tpu.pipeline_mode<synchronous>, transform_indices = @transform_2, window_bounds = array<i64: 32, 32>}, {pipeline_mode = #tpu.pipeline_mode<synchronous>, transform_indices = @transform_3, window_bounds = array<i64: 2, 32>}, {transform_indices = @transform_4, window_bounds = array<i64: 1, 2, 32>}]} {
    %c0 = arith.constant 0 : index
    %c0_0 = arith.constant 0 : index
    %0 = vector.load %arg1[%c0, %c0_0] : memref<32x32xf32, #tpu.memory_space<vmem>>, vector<32x32xf32>
    %c0_1 = arith.constant 0 : index
    %c0_2 = arith.constant 0 : index
    %1 = vector.load %arg2[%c0_1, %c0_2] : memref<32x32xf32, #tpu.memory_space<vmem>>, vector<32x32xf32>
    %cst = arith.constant dense<0.000000e+00> : vector<32x32xf32>
    %2 = tpu.matmul %0, %1, %cst {dimension_numbers = #tpu.dot_dimension_numbers<[1], [0], [0], [1], [0, 0, 1, 1], [], []>} : vector<32x32xf32>, vector<32x32xf32>, vector<32x32xf32> -> vector<32x32xf32>
    %c0_3 = arith.constant 0 : index
    %c0_4 = arith.constant 0 : index
    %3 = vector.load %arg4[%c0_3, %c0_4] : memref<2x32xf32, #tpu.memory_space<vmem>>, vector<1x32xf32>
    %4 = vector.broadcast %3 : vector<1x32xf32> to vector<32x32xf32>
    %5 = arith.subf %2, %4 : vector<32x32xf32>
    %c1 = arith.constant 1 : index
    %c0_5 = arith.constant 0 : index
    %6 = vector.load %arg4[%c1, %c0_5] : memref<2x32xf32, #tpu.memory_space<vmem>>, vector<1x32xf32>
    %7 = vector.broadcast %6 : vector<1x32xf32> to vector<32x32xf32>
    %8 = arith.mulf %5, %7 : vector<32x32xf32>
    %cst_6 = arith.constant 0.000000e+00 : f32
    %9 = vector.broadcast %cst_6 : f32 to vector<32x32xf32>
    %10 = arith.maximumf %8, %9 : vector<32x32xf32>
    %c0_7 = arith.constant 0 : index
    %c0_8 = arith.constant 0 : index
    %11 = vector.load %arg3[%c0_7, %c0_8] : memref<32x32xf32, #tpu.memory_space<vmem>>, vector<32x32xf32>
    %cst_9 = arith.constant dense<0.000000e+00> : vector<32x32xf32>
    %12 = tpu.matmul %10, %11, %cst_9 {dimension_numbers = #tpu.dot_dimension_numbers<[1], [0], [0], [1], [0, 0, 1, 1], [], []>} : vector<32x32xf32>, vector<32x32xf32>, vector<32x32xf32> -> vector<32x32xf32>
    %cst_10 = arith.constant dense<0.000000e+00> : vector<32xf32>
    %13 = vector.multi_reduction <add>, %12, %cst_10 [0] : vector<32x32xf32> to vector<32xf32>
    %14 = vector.shape_cast %13 : vector<32xf32> to vector<1x32xf32>
    %15 = arith.mulf %12, %12 : vector<32x32xf32>
    %cst_11 = arith.constant dense<0.000000e+00> : vector<32xf32>
    %16 = vector.multi_reduction <add>, %15, %cst_11 [0] : vector<32x32xf32> to vector<32xf32>
    %17 = vector.shape_cast %16 : vector<32xf32> to vector<1x32xf32>
    %18 = tpu.concatenate %14, %17 in 0 : vector<1x32xf32>, vector<1x32xf32> -> vector<2x32xf32>
    %c0_12 = arith.constant 0 : index
    %c0_13 = arith.constant 0 : index
    %c0_14 = arith.constant 0 : index
    %19 = vector.load %arg5[%c0_12, %c0_13, %c0_14] : memref<1x2x32xf32, #tpu.memory_space<vmem>>, vector<1x2x32xf32>
    %20 = vector.shape_cast %19 : vector<1x2x32xf32> to vector<2x32xf32>
    %21 = vector.shape_cast %18 : vector<2x32xf32> to vector<1x2x32xf32>
    tpu.vector_store %arg5[%c0_12, %c0_13, %c0_14], %21 {strides = array<i32>} : memref<1x2x32xf32, #tpu.memory_space<vmem>>, vector<1x2x32xf32>,
    return
  }
  func.func @transform_0(%arg0: i32) -> (i32, i32) {
    %c0_i32 = arith.constant 0 : i32
    %c0_i32_0 = arith.constant 0 : i32
    return %arg0, %c0_i32 : i32, i32
  }
  func.func @transform_1(%arg0: i32) -> (i32, i32) {
    %c0_i32 = arith.constant 0 : i32
    %c0_i32_0 = arith.constant 0 : i32
    %c0_i32_1 = arith.constant 0 : i32
    return %c0_i32, %c0_i32_0 : i32, i32
  }
  func.func @transform_2(%arg0: i32) -> (i32, i32) {
    %c0_i32 = arith.constant 0 : i32
    %c0_i32_0 = arith.constant 0 : i32
    %c0_i32_1 = arith.constant 0 : i32
    return %c0_i32, %c0_i32_0 : i32, i32
  }
  func.func @transform_3(%arg0: i32) -> (i32, i32) {
    %c0_i32 = arith.constant 0 : i32
    %c0_i32_0 = arith.constant 0 : i32
    %c0_i32_1 = arith.constant 0 : i32
    return %c0_i32, %c0_i32_0 : i32, i32
  }
  func.func @transform_4(%arg0: i32) -> (i32, i32, i32) {
    %c0_i32 = arith.constant 0 : i32
    %c0_i32_0 = arith.constant 0 : i32
    %c0_i32_1 = arith.constant 0 : i32
    return %arg0, %c0_i32, %c0_i32_0 : i32, i32, i32
  }
}

module attributes {stable_mosaic.version = 11 : i64} {
  func.func @_fast_h1_stats_kernel(%arg0: i32, %arg1: memref<32x32xf32, #tpu.memory_space<vmem>>, %arg2: memref<32x32xf32, #tpu.memory_space<vmem>>, %arg3: memref<1x2x32xf32, #tpu.memory_space<vmem>>) attributes {dimension_semantics = [#tpu.dimension_semantics<parallel>], iteration_bounds = array<i64: 8>, scalar_prefetch = 0 : i64, scratch_operands = 0 : i64, tpu.core_type = #tpu.core_type<tc>, window_params = [{transform_indices = @transform_0, window_bounds = array<i64: 32, 32>}, {pipeline_mode = #tpu.pipeline_mode<synchronous>, transform_indices = @transform_1, window_bounds = array<i64: 32, 32>}, {transform_indices = @transform_2, window_bounds = array<i64: 1, 2, 32>}]} {
    %c0 = arith.constant 0 : index
    %c0_0 = arith.constant 0 : index
    %0 = vector.load %arg1[%c0, %c0_0] : memref<32x32xf32, #tpu.memory_space<vmem>>, vector<32x32xf32>
    %c0_1 = arith.constant 0 : index
    %c0_2 = arith.constant 0 : index
    %1 = vector.load %arg2[%c0_1, %c0_2] : memref<32x32xf32, #tpu.memory_space<vmem>>, vector<32x32xf32>
    %cst = arith.constant dense<0.000000e+00> : vector<32x32xf32>
    %2 = tpu.matmul %0, %1, %cst {dimension_numbers = #tpu.dot_dimension_numbers<[1], [0], [0], [1], [0, 0, 1, 1], [], []>} : vector<32x32xf32>, vector<32x32xf32>, vector<32x32xf32> -> vector<32x32xf32>
    %cst_3 = arith.constant dense<0.000000e+00> : vector<32xf32>
    %3 = vector.multi_reduction <add>, %2, %cst_3 [0] : vector<32x32xf32> to vector<32xf32>
    %4 = vector.shape_cast %3 : vector<32xf32> to vector<1x32xf32>
    %5 = arith.mulf %2, %2 : vector<32x32xf32>
    %cst_4 = arith.constant dense<0.000000e+00> : vector<32xf32>
    %6 = vector.multi_reduction <add>, %5, %cst_4 [0] : vector<32x32xf32> to vector<32xf32>
    %7 = vector.shape_cast %6 : vector<32xf32> to vector<1x32xf32>
    %8 = tpu.concatenate %4, %7 in 0 : vector<1x32xf32>, vector<1x32xf32> -> vector<2x32xf32>
    %c0_5 = arith.constant 0 : index
    %c0_6 = arith.constant 0 : index
    %c0_7 = arith.constant 0 : index
    %9 = vector.load %arg3[%c0_5, %c0_6, %c0_7] : memref<1x2x32xf32, #tpu.memory_space<vmem>>, vector<1x2x32xf32>
    %10 = vector.shape_cast %9 : vector<1x2x32xf32> to vector<2x32xf32>
    %11 = vector.shape_cast %8 : vector<2x32xf32> to vector<1x2x32xf32>
    tpu.vector_store %arg3[%c0_5, %c0_6, %c0_7], %11 {strides = array<i32>} : memref<1x2x32xf32, #tpu.memory_space<vmem>>, vector<1x2x32xf32>,
    return
  }
  func.func @transform_0(%arg0: i32) -> (i32, i32) {
    %c0_i32 = arith.constant 0 : i32
    %c0_i32_0 = arith.constant 0 : i32
    return %arg0, %c0_i32 : i32, i32
  }
  func.func @transform_1(%arg0: i32) -> (i32, i32) {
    %c0_i32 = arith.constant 0 : i32
    %c0_i32_0 = arith.constant 0 : i32
    %c0_i32_1 = arith.constant 0 : i32
    return %c0_i32, %c0_i32_0 : i32, i32
  }
  func.func @transform_2(%arg0: i32) -> (i32, i32, i32) {
    %c0_i32 = arith.constant 0 : i32
    %c0_i32_0 = arith.constant 0 : i32
    %c0_i32_1 = arith.constant 0 : i32
    return %arg0, %c0_i32, %c0_i32_0 : i32, i32, i32
  }
}

module attributes {stable_mosaic.version = 11 : i64} {
  func.func @_fast_out_kernel(%arg0: i32, %arg1: memref<32x32xf32, #tpu.memory_space<vmem>>, %arg2: memref<32x32xf32, #tpu.memory_space<vmem>>, %arg3: memref<32x32xf32, #tpu.memory_space<vmem>>, %arg4: memref<2x32xf32, #tpu.memory_space<vmem>>, %arg5: memref<2x32xf32, #tpu.memory_space<vmem>>, %arg6: memref<32x32xf32, #tpu.memory_space<vmem>>) attributes {dimension_semantics = [#tpu.dimension_semantics<parallel>], iteration_bounds = array<i64: 8>, scalar_prefetch = 0 : i64, scratch_operands = 0 : i64, tpu.core_type = #tpu.core_type<tc>, window_params = [{transform_indices = @transform_0, window_bounds = array<i64: 32, 32>}, {pipeline_mode = #tpu.pipeline_mode<synchronous>, transform_indices = @transform_1, window_bounds = array<i64: 32, 32>}, {pipeline_mode = #tpu.pipeline_mode<synchronous>, transform_indices = @transform_2, window_bounds = array<i64: 32, 32>}, {pipeline_mode = #tpu.pipeline_mode<synchronous>, transform_indices = @transform_3, window_bounds = array<i64: 2, 32>}, {pipeline_mode = #tpu.pipeline_mode<synchronous>, transform_indices = @transform_4, window_bounds = array<i64: 2, 32>}, {transform_indices = @transform_5, window_bounds = array<i64: 32, 32>}]} {
    %c0 = arith.constant 0 : index
    %c0_0 = arith.constant 0 : index
    %0 = vector.load %arg1[%c0, %c0_0] : memref<32x32xf32, #tpu.memory_space<vmem>>, vector<32x32xf32>
    %c0_1 = arith.constant 0 : index
    %c0_2 = arith.constant 0 : index
    %1 = vector.load %arg2[%c0_1, %c0_2] : memref<32x32xf32, #tpu.memory_space<vmem>>, vector<32x32xf32>
    %cst = arith.constant dense<0.000000e+00> : vector<32x32xf32>
    %2 = tpu.matmul %0, %1, %cst {dimension_numbers = #tpu.dot_dimension_numbers<[1], [0], [0], [1], [0, 0, 1, 1], [], []>} : vector<32x32xf32>, vector<32x32xf32>, vector<32x32xf32> -> vector<32x32xf32>
    %c0_3 = arith.constant 0 : index
    %c0_4 = arith.constant 0 : index
    %3 = vector.load %arg4[%c0_3, %c0_4] : memref<2x32xf32, #tpu.memory_space<vmem>>, vector<1x32xf32>
    %4 = vector.broadcast %3 : vector<1x32xf32> to vector<32x32xf32>
    %5 = arith.subf %2, %4 : vector<32x32xf32>
    %c1 = arith.constant 1 : index
    %c0_5 = arith.constant 0 : index
    %6 = vector.load %arg4[%c1, %c0_5] : memref<2x32xf32, #tpu.memory_space<vmem>>, vector<1x32xf32>
    %7 = vector.broadcast %6 : vector<1x32xf32> to vector<32x32xf32>
    %8 = arith.mulf %5, %7 : vector<32x32xf32>
    %cst_6 = arith.constant 0.000000e+00 : f32
    %9 = vector.broadcast %cst_6 : f32 to vector<32x32xf32>
    %10 = arith.maximumf %8, %9 : vector<32x32xf32>
    %c0_7 = arith.constant 0 : index
    %c0_8 = arith.constant 0 : index
    %11 = vector.load %arg3[%c0_7, %c0_8] : memref<32x32xf32, #tpu.memory_space<vmem>>, vector<32x32xf32>
    %cst_9 = arith.constant dense<0.000000e+00> : vector<32x32xf32>
    %12 = tpu.matmul %10, %11, %cst_9 {dimension_numbers = #tpu.dot_dimension_numbers<[1], [0], [0], [1], [0, 0, 1, 1], [], []>} : vector<32x32xf32>, vector<32x32xf32>, vector<32x32xf32> -> vector<32x32xf32>
    %c0_10 = arith.constant 0 : index
    %c0_11 = arith.constant 0 : index
    %13 = vector.load %arg5[%c0_10, %c0_11] : memref<2x32xf32, #tpu.memory_space<vmem>>, vector<1x32xf32>
    %14 = vector.broadcast %13 : vector<1x32xf32> to vector<32x32xf32>
    %15 = arith.subf %12, %14 : vector<32x32xf32>
    %c1_12 = arith.constant 1 : index
    %c0_13 = arith.constant 0 : index
    %16 = vector.load %arg5[%c1_12, %c0_13] : memref<2x32xf32, #tpu.memory_space<vmem>>, vector<1x32xf32>
    %17 = vector.broadcast %16 : vector<1x32xf32> to vector<32x32xf32>
    %18 = arith.mulf %15, %17 : vector<32x32xf32>
    %c0_14 = arith.constant 0 : index
    %c0_15 = arith.constant 0 : index
    %19 = vector.load %arg6[%c0_14, %c0_15] : memref<32x32xf32, #tpu.memory_space<vmem>>, vector<32x32xf32>
    tpu.vector_store %arg6[%c0_14, %c0_15], %18 {strides = array<i32>} : memref<32x32xf32, #tpu.memory_space<vmem>>, vector<32x32xf32>,
    return
  }
  func.func @transform_0(%arg0: i32) -> (i32, i32) {
    %c0_i32 = arith.constant 0 : i32
    %c0_i32_0 = arith.constant 0 : i32
    return %arg0, %c0_i32 : i32, i32
  }
  func.func @transform_1(%arg0: i32) -> (i32, i32) {
    %c0_i32 = arith.constant 0 : i32
    %c0_i32_0 = arith.constant 0 : i32
    %c0_i32_1 = arith.constant 0 : i32
    return %c0_i32, %c0_i32_0 : i32, i32
  }
  func.func @transform_2(%arg0: i32) -> (i32, i32) {
    %c0_i32 = arith.constant 0 : i32
    %c0_i32_0 = arith.constant 0 : i32
    %c0_i32_1 = arith.constant 0 : i32
    return %c0_i32, %c0_i32_0 : i32, i32
  }
  func.func @transform_3(%arg0: i32) -> (i32, i32) {
    %c0_i32 = arith.constant 0 : i32
    %c0_i32_0 = arith.constant 0 : i32
    %c0_i32_1 = arith.constant 0 : i32
    return %c0_i32, %c0_i32_0 : i32, i32
  }
  func.func @transform_4(%arg0: i32) -> (i32, i32) {
    %c0_i32 = arith.constant 0 : i32
    %c0_i32_0 = arith.constant 0 : i32
    %c0_i32_1 = arith.constant 0 : i32
    return %c0_i32, %c0_i32_0 : i32, i32
  }
  func.func @transform_5(%arg0: i32) -> (i32, i32) {
    %c0_i32 = arith.constant 0 : i32
    %c0_i32_0 = arith.constant 0 : i32
    return %arg0, %c0_i32 : i32, i32
  }
}

</mosaic_0001>

<llo_original>
// kernel: st_layer_forward.4
$region0: #{st_layer_forward.4}
  #allocation0 [shape = 'u32[]', space=smem, size = 0x4, offset = 0x4, fixed_abs, tag = 'smem constant byte address 0x4 - core index']
  #allocation1 [shape = 'u32[144,128]{1,0:T(1,128)}', space=vmem, size = 0x12000, scoped, tag = 'internal scratch']
  %s0 = inlined_call_operand.vmem [shape: f32[256,32], index: 0, kind: input, shape index: {}]
  %s1 = inlined_call_operand.vmem [shape: f32[32,32], index: 1, kind: input, shape index: {}]
  %s2 = inlined_call_operand.vmem [shape: f32[32,32], index: 2, kind: input, shape index: {}]
  %s3 = inlined_call_operand.vmem [shape: f32[2,32], index: 3, kind: input, shape index: {}]
  %s4 = inlined_call_operand.vmem [shape: f32[8,2,32], index: 4, kind: output, shape index: {}]
  %s5 = sld [smem:[#allocation0]]
  $region49: #{st_layer_forward.4} parent=0
    _
  %s7 = ssub.s32 1, %s5
  %s8 = scalar_select 0, %s7, %s5
  loop: start=0, step=1, limit=10
  $region2: #{st_layer_forward.4} parent=0 // loop_pre_header
    _
  $region3: #{st_layer_forward.4} parent=0 // loop_header
    %s10 = sphi 0, %s14
    %p11 = scmp.ge.s32.totalorder %s10, 10
    %s20 = sphi 0, %s22
    %s23 = sphi 0, %s20
    %s24 = sphi 0, %s23
    %s40 = sphi 0, %s24
    %s44 = sphi 0, %s44
    %s46 = sphi 0, %s44
    %s47 = sphi 0, %s46
    %s61 = sphi 0, %s47
    %s65 = sphi 0, %s65
    %s67 = sphi 0, %s65
    %s68 = sphi 0, %s67
    %s82 = sphi 0, %s68
    %s86 = sphi 0, %s86
    %s88 = sphi 0, %s86
    %s89 = sphi 0, %s88
    %s103 = sphi 0, %s89
    %s109 = sphi 0, %s111
    %s112 = sphi 0, %s109
    %s113 = sphi 0, %s112
    %s129 = sphi 0, %s113
  $region4: #{st_layer_forward.4} parent=0 // loop_header_branch
    %13 = sbr.rel (%p11) target = $region8
  $region5: #{st_layer_forward.4} parent=0 // loop_body
    %s15 = ssub.s32 %s10, 1
    %s16 = ssub.s32 %s10, 2
    %s17 = sadd.s32 %s10, 1
    %s18 = ssub.s32 %s10, %s17
    %p19 = scmp.eq.s32.totalorder %s18, 0
    %s21 = sadd.s32 %s20, 1
    %s22 = scalar_select %p19, %s20, %s21
    %p25 = pneg %p19
    %p26 = scmp.eq.s32.totalorder %s10, 7
    %p27 = por %p25, %p26
    %p28 = scmp.ne.s32.totalorder %s20, %s23
    %p29 = scmp.eq.s32.totalorder %s10, 0
    %p30 = por %p28, %p29
    %p31 = scmp.ne.s32.totalorder %s20, %s23
    %p32 = scmp.eq.s32.totalorder %s15, 7
    %p33 = por %p31, %p32
    %p34 = scmp.ne.s32.totalorder %s23, %s24
    %p35 = scmp.eq.s32.totalorder %s15, 0
    %p36 = por %p34, %p35
    %p37 = scmp.ne.s32.totalorder %s23, %s24
    %p38 = scmp.eq.s32.totalorder %s16, 7
    %p39 = por %p37, %p38
    %p41 = scmp.ne.s32.totalorder %s24, %s40
    %p42 = scmp.eq.s32.totalorder %s16, 0
    %p43 = por %p41, %p42
    %s45 = sadd.s32 %s44, 1
    %p48 = scmp.eq.s32.totalorder %s10, 7
    %p49 = scmp.ne.s32.totalorder %s44, %s46
    %p50 = scmp.eq.s32.totalorder %s10, 0
    %p51 = por %p49, %p50
    %p52 = scmp.ne.s32.totalorder %s44, %s46
    %p53 = scmp.eq.s32.totalorder %s15, 7
    %p54 = por %p52, %p53
    %p55 = scmp.ne.s32.totalorder %s46, %s47
    %p56 = scmp.eq.s32.totalorder %s15, 0
    %p57 = por %p55, %p56
    %p58 = scmp.ne.s32.totalorder %s46, %s47
    %p59 = scmp.eq.s32.totalorder %s16, 7
    %p60 = por %p58, %p59
    %p62 = scmp.ne.s32.totalorder %s47, %s61
    %p63 = scmp.eq.s32.totalorder %s16, 0
    %p64 = por %p62, %p63
    %s66 = sadd.s32 %s65, 1
    %p69 = scmp.eq.s32.totalorder %s10, 7
    %p70 = scmp.ne.s32.totalorder %s65, %s67
    %p71 = scmp.eq.s32.totalorder %s10, 0
    %p72 = por %p70, %p71
    %p73 = scmp.ne.s32.totalorder %s65, %s67
    %p74 = scmp.eq.s32.totalorder %s15, 7
    %p75 = por %p73, %p74
    %p76 = scmp.ne.s32.totalorder %s67, %s68
    %p77 = scmp.eq.s32.totalorder %s15, 0
    %p78 = por %p76, %p77
    %p79 = scmp.ne.s32.totalorder %s67, %s68
    %p80 = scmp.eq.s32.totalorder %s16, 7
    %p81 = por %p79, %p80
    %p83 = scmp.ne.s32.totalorder %s68, %s82
    %p84 = scmp.eq.s32.totalorder %s16, 0
    %p85 = por %p83, %p84
    %s87 = sadd.s32 %s86, 1
    %p90 = scmp.eq.s32.totalorder %s10, 7
    %p91 = scmp.ne.s32.totalorder %s86, %s88
    %p92 = scmp.eq.s32.totalorder %s10, 0
    %p93 = por %p91, %p92
    %p94 = scmp.ne.s32.totalorder %s86, %s88
    %p95 = scmp.eq.s32.totalorder %s15, 7
    %p96 = por %p94, %p95
    %p97 = scmp.ne.s32.totalorder %s88, %s89
    %p98 = scmp.eq.s32.totalorder %s15, 0
    %p99 = por %p97, %p98
    %p100 = scmp.ne.s32.totalorder %s88, %s89
    %p101 = scmp.eq.s32.totalorder %s16, 7
    %p102 = por %p100, %p101
    %p104 = scmp.ne.s32.totalorder %s89, %s103
    %p105 = scmp.eq.s32.totalorder %s16, 0
    %p106 = por %p104, %p105
    %s107 = ssub.s32 %s10, %s17
    %p108 = scmp.eq.s32.totalorder %s107, 0
    %s110 = sadd.s32 %s109, 1
    %s111 = scalar_select %p108, %s109, %s110
    %p114 = pneg %p108
    %p115 = scmp.eq.s32.totalorder %s10, 7
    %p116 = por %p114, %p115
    %p117 = scmp.ne.s32.totalorder %s109, %s112
    %p118 = scmp.eq.s32.totalorder %s10, 0
    %p119 = por %p117, %p118
    %p120 = scmp.ne.s32.totalorder %s109, %s112
    %p121 = scmp.eq.s32.totalorder %s15, 7
    %p122 = por %p120, %p121
    %p123 = scmp.ne.s32.totalorder %s112, %s113
    %p124 = scmp.eq.s32.totalorder %s15, 0
    %p125 = por %p123, %p124
    %p126 = scmp.ne.s32.totalorder %s112, %s113
    %p127 = scmp.eq.s32.totalorder %s16, 7
    %p128 = por %p126, %p127
    %p130 = scmp.ne.s32.totalorder %s113, %s129
    %p131 = scmp.eq.s32.totalorder %s16, 0
    %p132 = por %p130, %p131
    %p133 = scmp.le.s32.totalorder 1, %s10
    %p134 = scmp.lt.s32.totalorder %s10, 9
    %p135 = pnand %p133, %p134
    %p136 = pneg %p135
    // Predicated region
    $region9: #{st_layer_forward.4} parent=5 // pred_check
      _
    $region10: #{st_layer_forward.4} parent=5 // pred_check_branch
      %138 = sbr.rel (%p135) target = $region12
    $region11: #{st_layer_forward.4} parent=5 // pred_region
      %s139 = ssub.s32 %s10, 1
      // Predicated region
      $region13: #{st_layer_forward.4} parent=11 // pred_check
        %p140 = pneg %p57
      $region14: #{st_layer_forward.4} parent=11 // pred_check_branch
        %142 = sbr.rel (%p140) target = $region16
      $region15: #{st_layer_forward.4} parent=11 // pred_region
        _
      $region16: #{st_layer_forward.4} parent=11 // pred_fallthru
        _
      // Predicated region
      $region17: #{st_layer_forward.4} parent=11 // pred_check
        %p143 = pneg %p78
      $region18: #{st_layer_forward.4} parent=11 // pred_check_branch
        %145 = sbr.rel (%p143) target = $region20
      $region19: #{st_layer_forward.4} parent=11 // pred_region
        _
      $region20: #{st_layer_forward.4} parent=11 // pred_fallthru
        _
      // Predicated region
      $region21: #{st_layer_forward.4} parent=11 // pred_check
        %p146 = pneg %p99
      $region22: #{st_layer_forward.4} parent=11 // pred_check_branch
        %148 = sbr.rel (%p146) target = $region24
      $region23: #{st_layer_forward.4} parent=11 // pred_region
        _
      $region24: #{st_layer_forward.4} parent=11 // pred_fallthru
        _
    $region12: #{st_layer_forward.4} parent=5 // pred_fallthru
      _
    %p149 = scmp.lt.s32.totalorder %s10, 8
    // Predicated region
    $region25: #{st_layer_forward.4} parent=5 // pred_check
      %p150 = pneg %p149
    $region26: #{st_layer_forward.4} parent=5 // pred_check_branch
      %152 = sbr.rel (%p150) target = $region28
    $region27: #{st_layer_forward.4} parent=5 // pred_region
      // Predicated region
      $region29: #{st_layer_forward.4} parent=27 // pred_check
        %p153 = pneg %p30
      $region30: #{st_layer_forward.4} parent=27 // pred_check_branch
        %155 = sbr.rel (%p153) target = $region32
      $region31: #{st_layer_forward.4} parent=27 // pred_region
        %s156 = smul.u32 4, %s10
        %p157 = scmp.lt.s32.totalorder %s156, 31
        %s158 = scalar_select %p157, %s156, 31
        %s159 = smul.addr %s158, 8
        %s160 = scalar_lea.vmem %s0, %s159
        %s161 = smul.u32 4, %s10
      $region32: #{st_layer_forward.4} parent=27 // pred_fallthru
        _
    $region28: #{st_layer_forward.4} parent=5 // pred_fallthru
      _
    %p162 = scmp.le.s32.totalorder 1, %s10
    %p163 = scmp.lt.s32.totalorder %s10, 9
    %p164 = pnand %p162, %p163
    %p165 = pneg %p164
    // Predicated region
    $region33: #{st_layer_forward.4} parent=5 // pred_check
      _
    $region34: #{st_layer_forward.4} parent=5 // pred_check_branch
      %167 = sbr.rel (%p164) target = $region36
    $region35: #{st_layer_forward.4} parent=5 // pred_region
      %s168 = ssub.s32 %s10, 1
      %s169 = smul.u32 4, %s15
      %p170 = scmp.lt.s32.totalorder %s169, 31
      %s171 = scalar_select %p170, %s169, 31
      %s172 = smul.addr %s171, 8
      %s173 = scalar_lea.vmem %s0, %s172
      %p174 = pneg %p36
      %p175 = pneg %p33
      %p176 = pneg %p57
      %p177 = pneg %p54
      %p178 = pneg %p78
      %p179 = pneg %p75
      %p180 = pneg %p99
      %p181 = pneg %p96
      %p182 = pneg %p125
      %p183 = pneg %p122
      %p184 = scmp.lt.s32.totalorder %s15, 7
      %s185 = scalar_select %p184, %s15, 7
      %s186 = smul.addr %s185, 2
      %s187 = scalar_lea.vmem %s4, %s186
      %s188 = smul.u32 4, %s15
      %p189 = scmp.lt.s32.totalorder %s188, 31
      %s190 = scalar_select %p189, %s188, 31
      %s191 = smul.addr %s190, 8
      %s192 = scalar_lea.vmem %s0, %s191
      %s193 = smul.u32 4, %s15
      %p194 = scmp.lt.s32.totalorder %s15, 7
      %s195 = scalar_select %p194, %s15, 7
      %s196 = smul.addr %s195, 2
      %s197 = scalar_lea.vmem %s4, %s196
      %v198 = vld [vmem:[%s192] sm:$0xff]
      %v199 = vld [vmem:[%s192 + $0x8] sm:$0xff]
      %v200 = vld [vmem:[%s192 + $0x10] sm:$0xff]
      %v201 = vld [vmem:[%s192 + $0x18] sm:$0xff]
      %v202 = vld [vmem:[%s1] sm:$0xff]
      %v203 = vld [vmem:[%s1 + $0x8] sm:$0xff]
      %v204 = vld [vmem:[%s1 + $0x10] sm:$0xff]
      %v205 = vld [vmem:[%s1 + $0x18] sm:$0xff]
      %vm206 = vcmask 261120
      %v208 = vsel %vm206, %v198, 0
      %v211 = vsel %vm206, %v199, 0
      %v214 = vsel %vm206, %v200, 0
      %v217 = vsel %vm206, %v201, 0
      %219 = vmatprep.subr.mxu0 0.0
      %220 = vmatpush1.msra.mxu0 0.0
      %221 = vmatprep.subr.mxu0 0.0
      %222 = vmatpush1.msra.mxu0 0.0
      %223 = vmatprep.subr.mxu0 0.0
      %224 = vmatpush1.msra.mxu0 0.0
      %225 = vmatprep.subr.mxu0 0.0
      %226 = vmatpush1.msra.mxu0 0.0
      %227 = vmatprep.subr.mxu0 0.0
      %228 = vmatpush1.msra.mxu0 0.0
      %229 = vmatprep.subr.mxu0 0.0
      %230 = vmatpush1.msra.mxu0 0.0
      %231 = vmatprep.subr.mxu0 0.0
      %232 = vmatpush1.msra.mxu0 0.0
      %233 = vmatprep.subr.mxu0 0.0
      %234 = vmatpush1.msra.mxu0 0.0
      %235 = vmatprep.subr.mxu0 0.0
      %236 = vmatpush1.msra.mxu0 0.0
      %237 = vmatprep.subr.mxu0 0.0
      %238 = vmatpush1.msra.mxu0 0.0
      %239 = vmatprep.subr.mxu0 0.0
      %240 = vmatpush1.msra.mxu0 0.0
      %241 = vmatprep.subr.mxu0 0.0
      %242 = vmatpush1.msra.mxu0 0.0
      %243 = vmatprep.subr.mxu0 0.0
      %244 = vmatpush1.msra.mxu0 %v205
      %245 = vmatprep.subr.mxu0 0.0
      %246 = vmatpush1.msra.mxu0 %v204
      %247 = vmatprep.subr.mxu0 0.0
      %248 = vmatpush1.msra.mxu0 %v203
      %249 = vmatprep.subr.mxu0 0.0
      %250 = vmatpush1.msra.mxu0 %v202
      %251 = vmatprep.subr.mxu0 0.0
      %252 = vmatpush2.msra.mxu0 0.0
      %253 = vmatprep.subr.mxu0 0.0
      %254 = vmatpush2.msra.mxu0 0.0
      %255 = vmatprep.subr.mxu0 0.0
      %256 = vmatpush2.msra.mxu0 0.0
      %257 = vmatprep.subr.mxu0 0.0
      %258 = vmatpush2.msra.mxu0 0.0
      %259 = vmatprep.subr.mxu0 0.0
      %260 = vmatpush2.msra.mxu0 0.0
      %261 = vmatprep.subr.mxu0 0.0
      %262 = vmatpush2.msra.mxu0 0.0
      %263 = vmatprep.subr.mxu0 0.0
      %264 = vmatpush2.msra.mxu0 0.0
      %265 = vmatprep.subr.mxu0 0.0
      %266 = vmatpush2.msra.mxu0 0.0
      %267 = vmatprep.subr.mxu0 0.0
      %268 = vmatpush2.msra.mxu0 0.0
      %269 = vmatprep.subr.mxu0 0.0
      %270 = vmatpush2.msra.mxu0 0.0
      %271 = vmatprep.subr.mxu0 0.0
      %272 = vmatpush2.msra.mxu0 0.0
      %273 = vmatprep.subr.mxu0 0.0
      %274 = vmatpush2.msra.mxu0 0.0
      %275 = vmatprep.subr.mxu0 0.0
      %276 = vmatpush2.msra.mxu0 0.0
      %277 = vmatprep.subr.mxu0 0.0
      %278 = vmatpush2.msra.mxu0 0.0
      %279 = vmatprep.subr.mxu0 0.0
      %280 = vmatpush2.msra.mxu0 0.0
      %281 = vmatprep.subr.mxu0 0.0
      %282 = vmatpush2.msra.mxu0 0.0
      %283 = vmatprep.mubr.f32.mxu0 0.0
      %284 = vmatmul.mubr.f32.gmra.mxu0 %v208
      %v285 = vpop.f32.mrf.mxu0
      %v286 = vadd.f32 0.0, %v285
      %v287 = vpop.f32.mrf.mxu0
      %288 = vmatprep.mubr.f32.mxu0 0.0
      %289 = vmatmul.mubr.f32.gmra.mxu0 %v211
      %v290 = vpop.f32.mrf.mxu0
      %v291 = vadd.f32 0.0, %v290
      %v292 = vpop.f32.mrf.mxu0
      %293 = vmatprep.mubr.f32.mxu0 0.0
      %294 = vmatmul.mubr.f32.gmra.mxu0 %v214
      %v295 = vpop.f32.mrf.mxu0
      %v296 = vadd.f32 0.0, %v295
      %v297 = vpop.f32.mrf.mxu0
      %298 = vmatprep.mubr.f32.mxu0 0.0
      %299 = vmatmul.mubr.f32.gmra.mxu0 %v217
      %v300 = vpop.f32.mrf.mxu0
      %v301 = vadd.f32 0.0, %v300
      %v302 = vpop.f32.mrf.mxu0
      %303 = vdwg.mxu0
      %v304 = vld [vmem:[%s3] sm:$0x1]
      %v305 = vlaneseq
      %v306 = vshrl.u32 %v305, 7
      %v307 = vsub.s32 0, %v306
      %v308 = vrot.slane %v304, %v307
      %v309 = vsub.f32 %v286, %v308
      %v310 = vsub.f32 %v291, %v308
      %v311 = vsub.f32 %v296, %v308
      %v312 = vsub.f32 %v301, %v308
      %v313 = vld [vmem:[%s3 + $0x1] sm:$0x1]
      %v314 = vlaneseq
      %v315 = vshrl.u32 %v314, 7
      %v316 = vsub.s32 0, %v315
      %v317 = vrot.slane %v313, %v316
      %v318 = vmul.f32 %v309, %v317
      %v319 = vmul.f32 %v310, %v317
      %v320 = vmul.f32 %v311, %v317
      %v321 = vmul.f32 %v312, %v317
      %v322 = vmax.f32 %v318, 0.0
      %v323 = vmax.f32 %v319, 0.0
      %v324 = vmax.f32 %v320, 0.0
      %v325 = vmax.f32 %v321, 0.0
      %v326 = vld [vmem:[%s2] sm:$0xff]
      %v327 = vld [vmem:[%s2 + $0x8] sm:$0xff]
      %v328 = vld [vmem:[%s2 + $0x10] sm:$0xff]
      %v329 = vld [vmem:[%s2 + $0x18] sm:$0xff]
      %v331 = vsel %vm206, %v322, 0
      %v334 = vsel %vm206, %v323, 0
      %v337 = vsel %vm206, %v324, 0
      %v340 = vsel %vm206, %v325, 0
      %342 = vmatprep.subr.mxu0 0.0
      %343 = vmatpush1.msra.mxu0 0.0
      %344 = vmatprep.subr.mxu0 0.0
      %345 = vmatpush1.msra.mxu0 0.0
      %346 = vmatprep.subr.mxu0 0.0
      %347 = vmatpush1.msra.mxu0 0.0
      %348 = vmatprep.subr.mxu0 0.0
      %349 = vmatpush1.msra.mxu0 0.0
      %350 = vmatprep.subr.mxu0 0.0
      %351 = vmatpush1.msra.mxu0 0.0
      %352 = vmatprep.subr.mxu0 0.0
      %353 = vmatpush1.msra.mxu0 0.0
      %354 = vmatprep.subr.mxu0 0.0
      %355 = vmatpush1.msra.mxu0 0.0
      %356 = vmatprep.subr.mxu0 0.0
      %357 = vmatpush1.msra.mxu0 0.0
      %358 = vmatprep.subr.mxu0 0.0
      %359 = vmatpush1.msra.mxu0 0.0
      %360 = vmatprep.subr.mxu0 0.0
      %361 = vmatpush1.msra.mxu0 0.0
      %362 = vmatprep.subr.mxu0 0.0
      %363 = vmatpush1.msra.mxu0 0.0
      %364 = vmatprep.subr.mxu0 0.0
      %365 = vmatpush1.msra.mxu0 0.0
      %366 = vmatprep.subr.mxu0 0.0
      %367 = vmatpush1.msra.mxu0 %v329
      %368 = vmatprep.subr.mxu0 0.0
      %369 = vmatpush1.msra.mxu0 %v328
      %370 = vmatprep.subr.mxu0 0.0
      %371 = vmatpush1.msra.mxu0 %v327
      %372 = vmatprep.subr.mxu0 0.0
      %373 = vmatpush1.msra.mxu0 %v326
      %374 = vmatprep.subr.mxu0 0.0
      %375 = vmatpush2.msra.mxu0 0.0
      %376 = vmatprep.subr.mxu0 0.0
      %377 = vmatpush2.msra.mxu0 0.0
      %378 = vmatprep.subr.mxu0 0.0
      %379 = vmatpush2.msra.mxu0 0.0
      %380 = vmatprep.subr.mxu0 0.0
      %381 = vmatpush2.msra.mxu0 0.0
      %382 = vmatprep.subr.mxu0 0.0
      %383 = vmatpush2.msra.mxu0 0.0
      %384 = vmatprep.subr.mxu0 0.0
      %385 = vmatpush2.msra.mxu0 0.0
      %386 = vmatprep.subr.mxu0 0.0
      %387 = vmatpush2.msra.mxu0 0.0
      %388 = vmatprep.subr.mxu0 0.0
      %389 = vmatpush2.msra.mxu0 0.0
      %390 = vmatprep.subr.mxu0 0.0
      %391 = vmatpush2.msra.mxu0 0.0
      %392 = vmatprep.subr.mxu0 0.0
      %393 = vmatpush2.msra.mxu0 0.0
      %394 = vmatprep.subr.mxu0 0.0
      %395 = vmatpush2.msra.mxu0 0.0
      %396 = vmatprep.subr.mxu0 0.0
      %397 = vmatpush2.msra.mxu0 0.0
      %398 = vmatprep.subr.mxu0 0.0
      %399 = vmatpush2.msra.mxu0 0.0
      %400 = vmatprep.subr.mxu0 0.0
      %401 = vmatpush2.msra.mxu0 0.0
      %402 = vmatprep.subr.mxu0 0.0
      %403 = vmatpush2.msra.mxu0 0.0
      %404 = vmatprep.subr.mxu0 0.0
      %405 = vmatpush2.msra.mxu0 0.0
      %406 = vmatprep.mubr.f32.mxu0 0.0
      %407 = vmatmul.mubr.f32.gmra.mxu0 %v331
      %v408 = vpop.f32.mrf.mxu0
      %v409 = vadd.f32 0.0, %v408
      %v410 = vpop.f32.mrf.mxu0
      %411 = vmatprep.mubr.f32.mxu0 0.0
      %412 = vmatmul.mubr.f32.gmra.mxu0 %v334
      %v413 = vpop.f32.mrf.mxu0
      %v414 = vadd.f32 0.0, %v413
      %v415 = vpop.f32.mrf.mxu0
      %416 = vmatprep.mubr.f32.mxu0 0.0
      %417 = vmatmul.mubr.f32.gmra.mxu0 %v337
      %v418 = vpop.f32.mrf.mxu0
      %v419 = vadd.f32 0.0, %v418
      %v420 = vpop.f32.mrf.mxu0
      %421 = vmatprep.mubr.f32.mxu0 0.0
      %422 = vmatmul.mubr.f32.gmra.mxu0 %v340
      %v423 = vpop.f32.mrf.mxu0
      %v424 = vadd.f32 0.0, %v423
      %v425 = vpop.f32.mrf.mxu0
      %426 = vdwg.mxu0
      %v427 = vsel %vm206, %v409, 0.0
      %v428 = vsel %vm206, %v414, 0.0
      %v429 = vadd.f32 %v427, %v428
      %v430 = vsel %vm206, %v419, 0.0
      %v431 = vadd.f32 %v429, %v430
      %v432 = vsel %vm206, %v424, 0.0
      %v433 = vadd.f32 %v431, %v432
      %v434 = vrot.slane %v433, 4
      %v435 = vadd.f32 %v433, %v434
      %v436 = vrot.slane %v435, 2
      %v437 = vadd.f32 %v435, %v436
      %v438 = vrot.slane %v437, 1
      %v439 = vadd.f32 %v437, %v438
      %v440 = vmul.f32 %v409, %v409
      %v441 = vmul.f32 %v414, %v414
      %v442 = vmul.f32 %v419, %v419
      %v443 = vmul.f32 %v424, %v424
      %v444 = vsel %vm206, %v440, 0.0
      %v445 = vsel %vm206, %v441, 0.0
      %v446 = vadd.f32 %v444, %v445
      %v447 = vsel %vm206, %v442, 0.0
      %v448 = vadd.f32 %v446, %v447
      %v449 = vsel %vm206, %v443, 0.0
      %v450 = vadd.f32 %v448, %v449
      %v451 = vrot.slane %v450, 4
      %v452 = vadd.f32 %v450, %v451
      %v453 = vrot.slane %v452, 2
      %v454 = vadd.f32 %v452, %v453
      %v455 = vrot.slane %v454, 1
      %v456 = vadd.f32 %v454, %v455
      %vm457 = vcmask 1040384
      %v458 = vsel %vm457, %v439, %v456
      %vm459 = vcmask 254976
      %460 = vst.msk [vmem:[%s197] sm:$0x3] %vm459, %v458
      %p461 = scmp.lt.s32.totalorder %s15, 7
      %s462 = scalar_select %p461, %s15, 7
      %s463 = smul.addr %s462, 2
      %s464 = scalar_lea.vmem %s4, %s463
      // Predicated region
      $region37: #{st_layer_forward.4} parent=35 // pred_check
        %p465 = pneg %p122
      $region38: #{st_layer_forward.4} parent=35 // pred_check_branch
        %467 = sbr.rel (%p465) target = $region40
      $region39: #{st_layer_forward.4} parent=35 // pred_region
        _
      $region40: #{st_layer_forward.4} parent=35 // pred_fallthru
        _
    $region36: #{st_layer_forward.4} parent=5 // pred_fallthru
      _
    %p468 = scmp.le.s32.totalorder 2, %s10
    // Predicated region
    $region41: #{st_layer_forward.4} parent=5 // pred_check
      %p469 = pneg %p468
    $region42: #{st_layer_forward.4} parent=5 // pred_check_branch
      %471 = sbr.rel (%p469) target = $region44
    $region43: #{st_layer_forward.4} parent=5 // pred_region
      %s472 = ssub.s32 %s10, 2
      // Predicated region
      $region45: #{st_layer_forward.4} parent=43 // pred_check
        %p473 = pneg %p128
      $region46: #{st_layer_forward.4} parent=43 // pred_check_branch
        %475 = sbr.rel (%p473) target = $region48
      $region47: #{st_layer_forward.4} parent=43 // pred_region
        %p476 = scmp.lt.s32.totalorder %s16, 7
        %s477 = scalar_select %p476, %s16, 7
        %s478 = smul.addr %s477, 2
        %s479 = scalar_lea.vmem %s4, %s478
      $region48: #{st_layer_forward.4} parent=43 // pred_fallthru
        _
    $region44: #{st_layer_forward.4} parent=5 // pred_fallthru
      _
  $region6: #{st_layer_forward.4} parent=0 // loop_footer
    %s14 = sadd.s32 1, %s10
  $region7: #{st_layer_forward.4} parent=0 // loop_footer_branch
    %9 = sbr.rel target = $region3
  $region8: #{st_layer_forward.4} parent=0 // loop_exit
    _

// kernel: st_layer_forward.3
$region0: #{st_layer_forward.3}
  #allocation0 [shape = 'u32[]', space=smem, size = 0x4, offset = 0x4, fixed_abs, tag = 'smem constant byte address 0x4 - core index']
  #allocation1 [shape = 'u32[144,128]{1,0:T(1,128)}', space=vmem, size = 0x12000, scoped, tag = 'internal scratch']
  %s0 = inlined_call_operand.hbm [shape: f32[256,32], index: 0, kind: input, shape index: {}]
  %s1 = inlined_call_operand.hbm [shape: f32[32,32], index: 1, kind: input, shape index: {}]
  %s2 = inlined_call_operand.vmem [shape: f32[8,2,32], index: 2, kind: output, shape index: {}]
  %s3 = sld [smem:[#allocation0]]
  $region49: #{st_layer_forward.3} parent=0
    _
  %s5 = ssub.s32 1, %s3
  %s6 = scalar_select 0, %s5, %s3
  $region1: #{st_layer_forward.3} parent=0
    #allocation2 [shape = 'u8[32768]{0}', space=vmem, size = 0x8000, scoped, tag = 'input window, operand 0']
    #allocation3 [shape = 's32[2]{0}', space=sflag, size = 0x8, scoped, tag = 'scoped memory for st_layer_forward.3']
    #allocation4 [shape = 'u8[16384]{0}', space=vmem, size = 0x4000, scoped, tag = 'input window, operand 1, single buffered']
    #allocation5 [shape = 's32[1]{0}', space=sflag, size = 0x4, scoped, tag = 'scoped memory for st_layer_forward.3']
    %7 = vsyncpa [#allocation3], 0
    %s8 = scalar_lea.sflag [#allocation3], 1
    %9 = vsyncpa %s8, 0
    %10 = vsyncpa [#allocation5], 0
    loop: start=0, step=1, limit=10
    $region2: #{st_layer_forward.3} parent=1 // loop_pre_header
      _
    $region3: #{st_layer_forward.3} parent=1 // loop_header
      %s12 = sphi 0, %s16
      %p13 = scmp.ge.s32.totalorder %s12, 10
      %s22 = sphi 0, %s24
      %s25 = sphi 0, %s22
      %s26 = sphi 0, %s25
      %s42 = sphi 0, %s26
      %s46 = sphi 0, %s46
      %s48 = sphi 0, %s46
      %s49 = sphi 0, %s48
      %s63 = sphi 0, %s49
      %s69 = sphi 0, %s71
      %s72 = sphi 0, %s69
      %s73 = sphi 0, %s72
      %s89 = sphi 0, %s73
    $region4: #{st_layer_forward.3} parent=1 // loop_header_branch
      %15 = sbr.rel (%p13) target = $region8
    $region5: #{st_layer_forward.3} parent=1 // loop_body
      %s17 = ssub.s32 %s12, 1
      %s18 = ssub.s32 %s12, 2
      %s19 = sadd.s32 %s12, 1
      %s20 = ssub.s32 %s12, %s19
      %p21 = scmp.eq.s32.totalorder %s20, 0
      %s23 = sadd.s32 %s22, 1
      %s24 = scalar_select %p21, %s22, %s23
      %p27 = pneg %p21
      %p28 = scmp.eq.s32.totalorder %s12, 7
      %p29 = por %p27, %p28
      %p30 = scmp.ne.s32.totalorder %s22, %s25
      %p31 = scmp.eq.s32.totalorder %s12, 0
      %p32 = por %p30, %p31
      %p33 = scmp.ne.s32.totalorder %s22, %s25
      %p34 = scmp.eq.s32.totalorder %s17, 7
      %p35 = por %p33, %p34
      %p36 = scmp.ne.s32.totalorder %s25, %s26
      %p37 = scmp.eq.s32.totalorder %s17, 0
      %p38 = por %p36, %p37
      %p39 = scmp.ne.s32.totalorder %s25, %s26
      %p40 = scmp.eq.s32.totalorder %s18, 7
      %p41 = por %p39, %p40
      %p43 = scmp.ne.s32.totalorder %s26, %s42
      %p44 = scmp.eq.s32.totalorder %s18, 0
      %p45 = por %p43, %p44
      %s47 = sadd.s32 %s46, 1
      %p50 = scmp.eq.s32.totalorder %s12, 7
      %p51 = scmp.ne.s32.totalorder %s46, %s48
      %p52 = scmp.eq.s32.totalorder %s12, 0
      %p53 = por %p51, %p52
      %p54 = scmp.ne.s32.totalorder %s46, %s48
      %p55 = scmp.eq.s32.totalorder %s17, 7
      %p56 = por %p54, %p55
      %p57 = scmp.ne.s32.totalorder %s48, %s49
      %p58 = scmp.eq.s32.totalorder %s17, 0
      %p59 = por %p57, %p58
      %p60 = scmp.ne.s32.totalorder %s48, %s49
      %p61 = scmp.eq.s32.totalorder %s18, 7
      %p62 = por %p60, %p61
      %p64 = scmp.ne.s32.totalorder %s49, %s63
      %p65 = scmp.eq.s32.totalorder %s18, 0
      %p66 = por %p64, %p65
      %s67 = ssub.s32 %s12, %s19
      %p68 = scmp.eq.s32.totalorder %s67, 0
      %s70 = sadd.s32 %s69, 1
      %s71 = scalar_select %p68, %s69, %s70
      %p74 = pneg %p68
      %p75 = scmp.eq.s32.totalorder %s12, 7
      %p76 = por %p74, %p75
      %p77 = scmp.ne.s32.totalorder %s69, %s72
      %p78 = scmp.eq.s32.totalorder %s12, 0
      %p79 = por %p77, %p78
      %p80 = scmp.ne.s32.totalorder %s69, %s72
      %p81 = scmp.eq.s32.totalorder %s17, 7
      %p82 = por %p80, %p81
      %p83 = scmp.ne.s32.totalorder %s72, %s73
      %p84 = scmp.eq.s32.totalorder %s17, 0
      %p85 = por %p83, %p84
      %p86 = scmp.ne.s32.totalorder %s72, %s73
      %p87 = scmp.eq.s32.totalorder %s18, 7
      %p88 = por %p86, %p87
      %p90 = scmp.ne.s32.totalorder %s73, %s89
      %p91 = scmp.eq.s32.totalorder %s18, 0
      %p92 = por %p90, %p91
      %p93 = scmp.le.s32.totalorder 1, %s12
      %p94 = scmp.lt.s32.totalorder %s12, 9
      %p95 = pnand %p93, %p94
      %p96 = pneg %p95
      // Predicated region
      $region9: #{st_layer_forward.3} parent=5 // pred_check
        _
      $region10: #{st_layer_forward.3} parent=5 // pred_check_branch
        %98 = sbr.rel (%p95) target = $region12
      $region11: #{st_layer_forward.3} parent=5 // pred_region
        %s99 = ssub.s32 %s12, 1
        // Predicated region
        $region13: #{st_layer_forward.3} parent=11 // pred_check
          %p100 = pneg %p59
        $region14: #{st_layer_forward.3} parent=11 // pred_check_branch
          %102 = sbr.rel (%p100) target = $region16
        $region15: #{st_layer_forward.3} parent=11 // pred_region
          %s104 = ssub.s32 512, 512
          %105 = vsyncadd [#allocation5], %s104
          %s106 = sshll.u32 [#allocation4], 4
          %s107 = int_to_ptr.vmem [resolvable:$true] %s106
          %112 = dma.hbm_to_vmem [thread:$0]  %s1, 512, %s107, [#allocation5], 128, 128, 8
        $region16: #{st_layer_forward.3} parent=11 // pred_fallthru
          _
      $region12: #{st_layer_forward.3} parent=5 // pred_fallthru
        _
      %p113 = scmp.lt.s32.totalorder %s12, 8
      // Predicated region
      $region17: #{st_layer_forward.3} parent=5 // pred_check
        %p114 = pneg %p113
      $region18: #{st_layer_forward.3} parent=5 // pred_check_branch
        %116 = sbr.rel (%p114) target = $region20
      $region19: #{st_layer_forward.3} parent=5 // pred_region
        // Predicated region
        $region21: #{st_layer_forward.3} parent=19 // pred_check
          %p117 = pneg %p32
        $region22: #{st_layer_forward.3} parent=19 // pred_check_branch
          %119 = sbr.rel (%p117) target = $region24
        $region23: #{st_layer_forward.3} parent=19 // pred_region
          %s120 = sand.u32 %s22, 1
          %s121 = scalar_lea.sflag [#allocation3], %s120
          %s122 = sand.u32 %s22, 1
          %s123 = smul.addr %s122, 32
          %s124 = scalar_lea.vmem [#allocation2], %s123
          %s125 = smul.u32 4, %s12
          %s127 = ssub.s32 512, 512
          %128 = vsyncadd %s121, %s127
          %s129 = smul.addr %s125, 128
          %s130 = scalar_lea.hbm %s0, %s129
          %s131 = sshll.u32 %s124, 4
          %s132 = int_to_ptr.vmem [resolvable:$true] %s131
          %137 = dma.hbm_to_vmem [thread:$0]  %s130, 512, %s132, %s121, 128, 128, 8
        $region24: #{st_layer_forward.3} parent=19 // pred_fallthru
          _
      $region20: #{st_layer_forward.3} parent=5 // pred_fallthru
        _
      %p138 = scmp.le.s32.totalorder 1, %s12
      %p139 = scmp.lt.s32.totalorder %s12, 9
      %p140 = pnand %p138, %p139
      %p141 = pneg %p140
      // Predicated region
      $region25: #{st_layer_forward.3} parent=5 // pred_check
        _
      $region26: #{st_layer_forward.3} parent=5 // pred_check_branch
        %143 = sbr.rel (%p140) target = $region28
      $region27: #{st_layer_forward.3} parent=5 // pred_region
        %s144 = ssub.s32 %s12, 1
        %s145 = sand.u32 %s25, 1
        %s146 = scalar_lea.sflag [#allocation3], %s145
        %s147 = sand.u32 %s25, 1
        %s148 = smul.addr %s147, 32
        %s149 = scalar_lea.vmem [#allocation2], %s148
        // Predicated region
        $region29: #{st_layer_forward.3} parent=27 // pred_check
          %p150 = pneg %p38
        $region30: #{st_layer_forward.3} parent=27 // pred_check_branch
          %152 = sbr.rel (%p150) target = $region32
        $region31: #{st_layer_forward.3} parent=27 // pred_region
          %153 = dma.done %s146, 512
        $region32: #{st_layer_forward.3} parent=27 // pred_fallthru
          _
        // Predicated region
        $region33: #{st_layer_forward.3} parent=27 // pred_check
          %p154 = pneg %p59
        $region34: #{st_layer_forward.3} parent=27 // pred_check_branch
          %156 = sbr.rel (%p154) target = $region36
        $region35: #{st_layer_forward.3} parent=27 // pred_region
          %157 = dma.done [#allocation5], 512
        $region36: #{st_layer_forward.3} parent=27 // pred_fallthru
          _
        %s158 = sand.u32 %s25, 1
        %s159 = scalar_lea.sflag [#allocation3], %s158
        %s160 = sand.u32 %s25, 1
        %s161 = smul.addr %s160, 32
        %s162 = scalar_lea.vmem [#allocation2], %s161
        %p163 = pneg %p38
        %p164 = pneg %p35
        %p165 = pneg %p59
        %p166 = pneg %p56
        %p167 = pneg %p85
        %p168 = pneg %p82
        %p169 = scmp.lt.s32.totalorder %s17, 7
        %s170 = scalar_select %p169, %s17, 7
        %s171 = smul.addr %s170, 2
        %s172 = scalar_lea.vmem %s2, %s171
        %s173 = smul.u32 4, %s17
        %p174 = scmp.lt.s32.totalorder %s17, 7
        %s175 = scalar_select %p174, %s17, 7
        %s176 = smul.addr %s175, 2
        %s177 = scalar_lea.vmem %s2, %s176
        %v178 = vld [vmem:[%s149] sm:$0xff]
        %v179 = vld [vmem:[%s149 + $0x8] sm:$0xff]
        %v180 = vld [vmem:[%s149 + $0x10] sm:$0xff]
        %v181 = vld [vmem:[%s149 + $0x18] sm:$0xff]
        %v182 = vld [vmem:[#allocation4] sm:$0xff]
        %v183 = vld [vmem:[#allocation4 + $0x8] sm:$0xff]
        %v184 = vld [vmem:[#allocation4 + $0x10] sm:$0xff]
        %v185 = vld [vmem:[#allocation4 + $0x18] sm:$0xff]
        %vm186 = vcmask 261120
        %v188 = vsel %vm186, %v178, 0
        %v191 = vsel %vm186, %v179, 0
        %v194 = vsel %vm186, %v180, 0
        %v197 = vsel %vm186, %v181, 0
        %199 = vmatprep.subr.mxu0 0.0
        %200 = vmatpush1.msra.mxu0 0.0
        %201 = vmatprep.subr.mxu0 0.0
        %202 = vmatpush1.msra.mxu0 0.0
        %203 = vmatprep.subr.mxu0 0.0
        %204 = vmatpush1.msra.mxu0 0.0
        %205 = vmatprep.subr.mxu0 0.0
        %206 = vmatpush1.msra.mxu0 0.0
        %207 = vmatprep.subr.mxu0 0.0
        %208 = vmatpush1.msra.mxu0 0.0
        %209 = vmatprep.subr.mxu0 0.0
        %210 = vmatpush1.msra.mxu0 0.0
        %211 = vmatprep.subr.mxu0 0.0
        %212 = vmatpush1.msra.mxu0 0.0
        %213 = vmatprep.subr.mxu0 0.0
        %214 = vmatpush1.msra.mxu0 0.0
        %215 = vmatprep.subr.mxu0 0.0
        %216 = vmatpush1.msra.mxu0 0.0
        %217 = vmatprep.subr.mxu0 0.0
        %218 = vmatpush1.msra.mxu0 0.0
        %219 = vmatprep.subr.mxu0 0.0
        %220 = vmatpush1.msra.mxu0 0.0
        %221 = vmatprep.subr.mxu0 0.0
        %222 = vmatpush1.msra.mxu0 0.0
        %223 = vmatprep.subr.mxu0 0.0
        %224 = vmatpush1.msra.mxu0 %v185
        %225 = vmatprep.subr.mxu0 0.0
        %226 = vmatpush1.msra.mxu0 %v184
        %227 = vmatprep.subr.mxu0 0.0
        %228 = vmatpush1.msra.mxu0 %v183
        %229 = vmatprep.subr.mxu0 0.0
        %230 = vmatpush1.msra.mxu0 %v182
        %231 = vmatprep.subr.mxu0 0.0
        %232 = vmatpush2.msra.mxu0 0.0
        %233 = vmatprep.subr.mxu0 0.0
        %234 = vmatpush2.msra.mxu0 0.0
        %235 = vmatprep.subr.mxu0 0.0
        %236 = vmatpush2.msra.mxu0 0.0
        %237 = vmatprep.subr.mxu0 0.0
        %238 = vmatpush2.msra.mxu0 0.0
        %239 = vmatprep.subr.mxu0 0.0
        %240 = vmatpush2.msra.mxu0 0.0
        %241 = vmatprep.subr.mxu0 0.0
        %242 = vmatpush2.msra.mxu0 0.0
        %243 = vmatprep.subr.mxu0 0.0
        %244 = vmatpush2.msra.mxu0 0.0
        %245 = vmatprep.subr.mxu0 0.0
        %246 = vmatpush2.msra.mxu0 0.0
        %247 = vmatprep.subr.mxu0 0.0
        %248 = vmatpush2.msra.mxu0 0.0
        %249 = vmatprep.subr.mxu0 0.0
        %250 = vmatpush2.msra.mxu0 0.0
        %251 = vmatprep.subr.mxu0 0.0
        %252 = vmatpush2.msra.mxu0 0.0
        %253 = vmatprep.subr.mxu0 0.0
        %254 = vmatpush2.msra.mxu0 0.0
        %255 = vmatprep.subr.mxu0 0.0
        %256 = vmatpush2.msra.mxu0 0.0
        %257 = vmatprep.subr.mxu0 0.0
        %258 = vmatpush2.msra.mxu0 0.0
        %259 = vmatprep.subr.mxu0 0.0
        %260 = vmatpush2.msra.mxu0 0.0
        %261 = vmatprep.subr.mxu0 0.0
        %262 = vmatpush2.msra.mxu0 0.0
        %263 = vmatprep.mubr.f32.mxu0 0.0
        %264 = vmatmul.mubr.f32.gmra.mxu0 %v188
        %v265 = vpop.f32.mrf.mxu0
        %v266 = vadd.f32 0.0, %v265
        %v267 = vpop.f32.mrf.mxu0
        %268 = vmatprep.mubr.f32.mxu0 0.0
        %269 = vmatmul.mubr.f32.gmra.mxu0 %v191
        %v270 = vpop.f32.mrf.mxu0
        %v271 = vadd.f32 0.0, %v270
        %v272 = vpop.f32.mrf.mxu0
        %273 = vmatprep.mubr.f32.mxu0 0.0
        %274 = vmatmul.mubr.f32.gmra.mxu0 %v194
        %v275 = vpop.f32.mrf.mxu0
        %v276 = vadd.f32 0.0, %v275
        %v277 = vpop.f32.mrf.mxu0
        %278 = vmatprep.mubr.f32.mxu0 0.0
        %279 = vmatmul.mubr.f32.gmra.mxu0 %v197
        %v280 = vpop.f32.mrf.mxu0
        %v281 = vadd.f32 0.0, %v280
        %v282 = vpop.f32.mrf.mxu0
        %283 = vdwg.mxu0
        %v284 = vsel %vm186, %v266, 0.0
        %v285 = vsel %vm186, %v271, 0.0
        %v286 = vadd.f32 %v284, %v285
        %v287 = vsel %vm186, %v276, 0.0
        %v288 = vadd.f32 %v286, %v287
        %v289 = vsel %vm186, %v281, 0.0
        %v290 = vadd.f32 %v288, %v289
        %v291 = vrot.slane %v290, 4
        %v292 = vadd.f32 %v290, %v291
        %v293 = vrot.slane %v292, 2
        %v294 = vadd.f32 %v292, %v293
        %v295 = vrot.slane %v294, 1
        %v296 = vadd.f32 %v294, %v295
        %v297 = vmul.f32 %v266, %v266
        %v298 = vmul.f32 %v271, %v271
        %v299 = vmul.f32 %v276, %v276
        %v300 = vmul.f32 %v281, %v281
        %v301 = vsel %vm186, %v297, 0.0
        %v302 = vsel %vm186, %v298, 0.0
        %v303 = vadd.f32 %v301, %v302
        %v304 = vsel %vm186, %v299, 0.0
        %v305 = vadd.f32 %v303, %v304
        %v306 = vsel %vm186, %v300, 0.0
        %v307 = vadd.f32 %v305, %v306
        %v308 = vrot.slane %v307, 4
        %v309 = vadd.f32 %v307, %v308
        %v310 = vrot.slane %v309, 2
        %v311 = vadd.f32 %v309, %v310
        %v312 = vrot.slane %v311, 1
        %v313 = vadd.f32 %v311, %v312
        %vm314 = vcmask 1040384
        %v315 = vsel %vm314, %v296, %v313
        %vm316 = vcmask 254976
        %317 = vst.msk [vmem:[%s177] sm:$0x3] %vm316, %v315
        %p318 = scmp.lt.s32.totalorder %s17, 7
        %s319 = scalar_select %p318, %s17, 7
        %s320 = smul.addr %s319, 2
        %s321 = scalar_lea.vmem %s2, %s320
        // Predicated region
        $region37: #{st_layer_forward.3} parent=27 // pred_check
          %p322 = pneg %p82
        $region38: #{st_layer_forward.3} parent=27 // pred_check_branch
          %324 = sbr.rel (%p322) target = $region40
        $region39: #{st_layer_forward.3} parent=27 // pred_region
          _
        $region40: #{st_layer_forward.3} parent=27 // pred_fallthru
          _
      $region28: #{st_layer_forward.3} parent=5 // pred_fallthru
        _
      %p325 = scmp.le.s32.totalorder 2, %s12
      // Predicated region
      $region41: #{st_layer_forward.3} parent=5 // pred_check
        %p326 = pneg %p325
      $region42: #{st_layer_forward.3} parent=5 // pred_check_branch
        %328 = sbr.rel (%p326) target = $region44
      $region43: #{st_layer_forward.3} parent=5 // pred_region
        %s329 = ssub.s32 %s12, 2
        // Predicated region
        $region45: #{st_layer_forward.3} parent=43 // pred_check
          %p330 = pneg %p88
        $region46: #{st_layer_forward.3} parent=43 // pred_check_branch
          %332 = sbr.rel (%p330) target = $region48
        $region47: #{st_layer_forward.3} parent=43 // pred_region
          %p333 = scmp.lt.s32.totalorder %s18, 7
          %s334 = scalar_select %p333, %s18, 7
          %s335 = smul.addr %s334, 2
          %s336 = scalar_lea.vmem %s2, %s335
        $region48: #{st_layer_forward.3} parent=43 // pred_fallthru
          _
      $region44: #{st_layer_forward.3} parent=5 // pred_fallthru
        _
    $region6: #{st_layer_forward.3} parent=1 // loop_footer
      %s16 = sadd.s32 1, %s12
    $region7: #{st_layer_forward.3} parent=1 // loop_footer_branch
      %11 = sbr.rel target = $region3
    $region8: #{st_layer_forward.3} parent=1 // loop_exit
      _
    %337 = vsyncpa [#allocation3], 1
    %s338 = scalar_lea.sflag [#allocation3], 1
    %339 = vsyncpa %s338, 1
    %340 = vsyncpa [#allocation5], 1

// kernel: st_layer_forward.5
$region0: #{st_layer_forward.5}
  #allocation0 [shape = 'u32[]', space=smem, size = 0x4, offset = 0x4, fixed_abs, tag = 'smem constant byte address 0x4 - core index']
  #allocation1 [shape = 'u32[144,128]{1,0:T(1,128)}', space=vmem, size = 0x12000, scoped, tag = 'internal scratch']
  %s0 = inlined_call_operand.vmem [shape: f32[256,32], index: 0, kind: input, shape index: {}]
  %s1 = inlined_call_operand.vmem [shape: f32[32,32], index: 1, kind: input, shape index: {}]
  %s2 = inlined_call_operand.vmem [shape: f32[32,32], index: 2, kind: input, shape index: {}]
  %s3 = inlined_call_operand.vmem [shape: f32[2,32], index: 3, kind: input, shape index: {}]
  %s4 = inlined_call_operand.vmem [shape: f32[2,32], index: 4, kind: input, shape index: {}]
  %s5 = inlined_call_operand.hbm [shape: f32[256,32], index: 5, kind: output, shape index: {}]
  %s6 = sld [smem:[#allocation0]]
  $region53: #{st_layer_forward.5} parent=0
    _
  %s8 = ssub.s32 1, %s6
  %s9 = scalar_select 0, %s8, %s6
  $region1: #{st_layer_forward.5} parent=0
    #allocation2 [shape = 'u8[32768]{0}', space=vmem, size = 0x8000, scoped, tag = 'output window, operand 0']
    #allocation3 [shape = 's32[2]{0}', space=sflag, size = 0x8, scoped, tag = 'scoped memory for st_layer_forward.5']
    %10 = vsyncpa [#allocation3], 0
    %s11 = scalar_lea.sflag [#allocation3], 1
    %12 = vsyncpa %s11, 0
    loop: start=0, step=1, limit=10
    $region2: #{st_layer_forward.5} parent=1 // loop_pre_header
      _
    $region3: #{st_layer_forward.5} parent=1 // loop_header
      %s14 = sphi 0, %s18
      %p15 = scmp.ge.s32.totalorder %s14, 10
      %s24 = sphi 0, %s26
      %s27 = sphi 0, %s24
      %s28 = sphi 0, %s27
      %s44 = sphi 0, %s28
      %s48 = sphi 0, %s48
      %s50 = sphi 0, %s48
      %s51 = sphi 0, %s50
      %s65 = sphi 0, %s51
      %s69 = sphi 0, %s69
      %s71 = sphi 0, %s69
      %s72 = sphi 0, %s71
      %s86 = sphi 0, %s72
      %s90 = sphi 0, %s90
      %s92 = sphi 0, %s90
      %s93 = sphi 0, %s92
      %s107 = sphi 0, %s93
      %s111 = sphi 0, %s111
      %s113 = sphi 0, %s111
      %s114 = sphi 0, %s113
      %s128 = sphi 0, %s114
      %s134 = sphi 0, %s136
      %s137 = sphi 0, %s134
      %s138 = sphi 0, %s137
      %s154 = sphi 0, %s138
    $region4: #{st_layer_forward.5} parent=1 // loop_header_branch
      %17 = sbr.rel (%p15) target = $region8
    $region5: #{st_layer_forward.5} parent=1 // loop_body
      %s19 = ssub.s32 %s14, 1
      %s20 = ssub.s32 %s14, 2
      %s21 = sadd.s32 %s14, 1
      %s22 = ssub.s32 %s14, %s21
      %p23 = scmp.eq.s32.totalorder %s22, 0
      %s25 = sadd.s32 %s24, 1
      %s26 = scalar_select %p23, %s24, %s25
      %p29 = pneg %p23
      %p30 = scmp.eq.s32.totalorder %s14, 7
      %p31 = por %p29, %p30
      %p32 = scmp.ne.s32.totalorder %s24, %s27
      %p33 = scmp.eq.s32.totalorder %s14, 0
      %p34 = por %p32, %p33
      %p35 = scmp.ne.s32.totalorder %s24, %s27
      %p36 = scmp.eq.s32.totalorder %s19, 7
      %p37 = por %p35, %p36
      %p38 = scmp.ne.s32.totalorder %s27, %s28
      %p39 = scmp.eq.s32.totalorder %s19, 0
      %p40 = por %p38, %p39
      %p41 = scmp.ne.s32.totalorder %s27, %s28
      %p42 = scmp.eq.s32.totalorder %s20, 7
      %p43 = por %p41, %p42
      %p45 = scmp.ne.s32.totalorder %s28, %s44
      %p46 = scmp.eq.s32.totalorder %s20, 0
      %p47 = por %p45, %p46
      %s49 = sadd.s32 %s48, 1
      %p52 = scmp.eq.s32.totalorder %s14, 7
      %p53 = scmp.ne.s32.totalorder %s48, %s50
      %p54 = scmp.eq.s32.totalorder %s14, 0
      %p55 = por %p53, %p54
      %p56 = scmp.ne.s32.totalorder %s48, %s50
      %p57 = scmp.eq.s32.totalorder %s19, 7
      %p58 = por %p56, %p57
      %p59 = scmp.ne.s32.totalorder %s50, %s51
      %p60 = scmp.eq.s32.totalorder %s19, 0
      %p61 = por %p59, %p60
      %p62 = scmp.ne.s32.totalorder %s50, %s51
      %p63 = scmp.eq.s32.totalorder %s20, 7
      %p64 = por %p62, %p63
      %p66 = scmp.ne.s32.totalorder %s51, %s65
      %p67 = scmp.eq.s32.totalorder %s20, 0
      %p68 = por %p66, %p67
      %s70 = sadd.s32 %s69, 1
      %p73 = scmp.eq.s32.totalorder %s14, 7
      %p74 = scmp.ne.s32.totalorder %s69, %s71
      %p75 = scmp.eq.s32.totalorder %s14, 0
      %p76 = por %p74, %p75
      %p77 = scmp.ne.s32.totalorder %s69, %s71
      %p78 = scmp.eq.s32.totalorder %s19, 7
      %p79 = por %p77, %p78
      %p80 = scmp.ne.s32.totalorder %s71, %s72
      %p81 = scmp.eq.s32.totalorder %s19, 0
      %p82 = por %p80, %p81
      %p83 = scmp.ne.s32.totalorder %s71, %s72
      %p84 = scmp.eq.s32.totalorder %s20, 7
      %p85 = por %p83, %p84
      %p87 = scmp.ne.s32.totalorder %s72, %s86
      %p88 = scmp.eq.s32.totalorder %s20, 0
      %p89 = por %p87, %p88
      %s91 = sadd.s32 %s90, 1
      %p94 = scmp.eq.s32.totalorder %s14, 7
      %p95 = scmp.ne.s32.totalorder %s90, %s92
      %p96 = scmp.eq.s32.totalorder %s14, 0
      %p97 = por %p95, %p96
      %p98 = scmp.ne.s32.totalorder %s90, %s92
      %p99 = scmp.eq.s32.totalorder %s19, 7
      %p100 = por %p98, %p99
      %p101 = scmp.ne.s32.totalorder %s92, %s93
      %p102 = scmp.eq.s32.totalorder %s19, 0
      %p103 = por %p101, %p102
      %p104 = scmp.ne.s32.totalorder %s92, %s93
      %p105 = scmp.eq.s32.totalorder %s20, 7
      %p106 = por %p104, %p105
      %p108 = scmp.ne.s32.totalorder %s93, %s107
      %p109 = scmp.eq.s32.totalorder %s20, 0
      %p110 = por %p108, %p109
      %s112 = sadd.s32 %s111, 1
      %p115 = scmp.eq.s32.totalorder %s14, 7
      %p116 = scmp.ne.s32.totalorder %s111, %s113
      %p117 = scmp.eq.s32.totalorder %s14, 0
      %p118 = por %p116, %p117
      %p119 = scmp.ne.s32.totalorder %s111, %s113
      %p120 = scmp.eq.s32.totalorder %s19, 7
      %p121 = por %p119, %p120
      %p122 = scmp.ne.s32.totalorder %s113, %s114
      %p123 = scmp.eq.s32.totalorder %s19, 0
      %p124 = por %p122, %p123
      %p125 = scmp.ne.s32.totalorder %s113, %s114
      %p126 = scmp.eq.s32.totalorder %s20, 7
      %p127 = por %p125, %p126
      %p129 = scmp.ne.s32.totalorder %s114, %s128
      %p130 = scmp.eq.s32.totalorder %s20, 0
      %p131 = por %p129, %p130
      %s132 = ssub.s32 %s14, %s21
      %p133 = scmp.eq.s32.totalorder %s132, 0
      %s135 = sadd.s32 %s134, 1
      %s136 = scalar_select %p133, %s134, %s135
      %p139 = pneg %p133
      %p140 = scmp.eq.s32.totalorder %s14, 7
      %p141 = por %p139, %p140
      %p142 = scmp.ne.s32.totalorder %s134, %s137
      %p143 = scmp.eq.s32.totalorder %s14, 0
      %p144 = por %p142, %p143
      %p145 = scmp.ne.s32.totalorder %s134, %s137
      %p146 = scmp.eq.s32.totalorder %s19, 7
      %p147 = por %p145, %p146
      %p148 = scmp.ne.s32.totalorder %s137, %s138
      %p149 = scmp.eq.s32.totalorder %s19, 0
      %p150 = por %p148, %p149
      %p151 = scmp.ne.s32.totalorder %s137, %s138
      %p152 = scmp.eq.s32.totalorder %s20, 7
      %p153 = por %p151, %p152
      %p155 = scmp.ne.s32.totalorder %s138, %s154
      %p156 = scmp.eq.s32.totalorder %s20, 0
      %p157 = por %p155, %p156
      %p158 = scmp.le.s32.totalorder 1, %s14
      %p159 = scmp.lt.s32.totalorder %s14, 9
      %p160 = pnand %p158, %p159
      %p161 = pneg %p160
      // Predicated region
      $region9: #{st_layer_forward.5} parent=5 // pred_check
        _
      $region10: #{st_layer_forward.5} parent=5 // pred_check_branch
        %163 = sbr.rel (%p160) target = $region12
      $region11: #{st_layer_forward.5} parent=5 // pred_region
        %s164 = ssub.s32 %s14, 1
        // Predicated region
        $region13: #{st_layer_forward.5} parent=11 // pred_check
          %p165 = pneg %p61
        $region14: #{st_layer_forward.5} parent=11 // pred_check_branch
          %167 = sbr.rel (%p165) target = $region16
        $region15: #{st_layer_forward.5} parent=11 // pred_region
          _
        $region16: #{st_layer_forward.5} parent=11 // pred_fallthru
          _
        // Predicated region
        $region17: #{st_layer_forward.5} parent=11 // pred_check
          %p168 = pneg %p82
        $region18: #{st_layer_forward.5} parent=11 // pred_check_branch
          %170 = sbr.rel (%p168) target = $region20
        $region19: #{st_layer_forward.5} parent=11 // pred_region
          _
        $region20: #{st_layer_forward.5} parent=11 // pred_fallthru
          _
        // Predicated region
        $region21: #{st_layer_forward.5} parent=11 // pred_check
          %p171 = pneg %p103
        $region22: #{st_layer_forward.5} parent=11 // pred_check_branch
          %173 = sbr.rel (%p171) target = $region24
        $region23: #{st_layer_forward.5} parent=11 // pred_region
          _
        $region24: #{st_layer_forward.5} parent=11 // pred_fallthru
          _
        // Predicated region
        $region25: #{st_layer_forward.5} parent=11 // pred_check
          %p174 = pneg %p124
        $region26: #{st_layer_forward.5} parent=11 // pred_check_branch
          %176 = sbr.rel (%p174) target = $region28
        $region27: #{st_layer_forward.5} parent=11 // pred_region
          _
        $region28: #{st_layer_forward.5} parent=11 // pred_fallthru
          _
      $region12: #{st_layer_forward.5} parent=5 // pred_fallthru
        _
      %p177 = scmp.lt.s32.totalorder %s14, 8
      // Predicated region
      $region29: #{st_layer_forward.5} parent=5 // pred_check
        %p178 = pneg %p177
      $region30: #{st_layer_forward.5} parent=5 // pred_check_branch
        %180 = sbr.rel (%p178) target = $region32
      $region31: #{st_layer_forward.5} parent=5 // pred_region
        // Predicated region
        $region33: #{st_layer_forward.5} parent=31 // pred_check
          %p181 = pneg %p34
        $region34: #{st_layer_forward.5} parent=31 // pred_check_branch
          %183 = sbr.rel (%p181) target = $region36
        $region35: #{st_layer_forward.5} parent=31 // pred_region
          %s184 = smul.u32 4, %s14
          %p185 = scmp.lt.s32.totalorder %s184, 31
          %s186 = scalar_select %p185, %s184, 31
          %s187 = smul.addr %s186, 8
          %s188 = scalar_lea.vmem %s0, %s187
          %s189 = smul.u32 4, %s14
        $region36: #{st_layer_forward.5} parent=31 // pred_fallthru
          _
      $region32: #{st_layer_forward.5} parent=5 // pred_fallthru
        _
      %p190 = scmp.le.s32.totalorder 1, %s14
      %p191 = scmp.lt.s32.totalorder %s14, 9
      %p192 = pnand %p190, %p191
      %p193 = pneg %p192
      // Predicated region
      $region37: #{st_layer_forward.5} parent=5 // pred_check
        _
      $region38: #{st_layer_forward.5} parent=5 // pred_check_branch
        %195 = sbr.rel (%p192) target = $region40
      $region39: #{st_layer_forward.5} parent=5 // pred_region
        %s196 = ssub.s32 %s14, 1
        %s197 = smul.u32 4, %s19
        %p198 = scmp.lt.s32.totalorder %s197, 31
        %s199 = scalar_select %p198, %s197, 31
        %s200 = smul.addr %s199, 8
        %s201 = scalar_lea.vmem %s0, %s200
        %p202 = pneg %p40
        %p203 = pneg %p37
        %p204 = pneg %p61
        %p205 = pneg %p58
        %p206 = pneg %p82
        %p207 = pneg %p79
        %p208 = pneg %p103
        %p209 = pneg %p100
        %p210 = pneg %p124
        %p211 = pneg %p121
        %p212 = pneg %p150
        %p213 = pneg %p147
        %s214 = sand.u32 %s137, 1
        %s215 = scalar_lea.sflag [#allocation3], %s214
        %s216 = sand.u32 %s137, 1
        %s217 = smul.addr %s216, 32
        %s218 = scalar_lea.vmem [#allocation2], %s217
        %s219 = smul.u32 4, %s19
        %p220 = scmp.lt.s32.totalorder %s219, 31
        %s221 = scalar_select %p220, %s219, 31
        %s222 = smul.addr %s221, 8
        %s223 = scalar_lea.vmem %s0, %s222
        %s224 = smul.u32 4, %s19
        %s225 = smul.u32 4, %s19
        %v226 = vld [vmem:[%s223] sm:$0xff]
        %v227 = vld [vmem:[%s223 + $0x8] sm:$0xff]
        %v228 = vld [vmem:[%s223 + $0x10] sm:$0xff]
        %v229 = vld [vmem:[%s223 + $0x18] sm:$0xff]
        %v230 = vld [vmem:[%s1] sm:$0xff]
        %v231 = vld [vmem:[%s1 + $0x8] sm:$0xff]
        %v232 = vld [vmem:[%s1 + $0x10] sm:$0xff]
        %v233 = vld [vmem:[%s1 + $0x18] sm:$0xff]
        %vm234 = vcmask 261120
        %v236 = vsel %vm234, %v226, 0
        %v239 = vsel %vm234, %v227, 0
        %v242 = vsel %vm234, %v228, 0
        %v245 = vsel %vm234, %v229, 0
        %247 = vmatprep.subr.mxu0 0.0
        %248 = vmatpush1.msra.mxu0 0.0
        %249 = vmatprep.subr.mxu0 0.0
        %250 = vmatpush1.msra.mxu0 0.0
        %251 = vmatprep.subr.mxu0 0.0
        %252 = vmatpush1.msra.mxu0 0.0
        %253 = vmatprep.subr.mxu0 0.0
        %254 = vmatpush1.msra.mxu0 0.0
        %255 = vmatprep.subr.mxu0 0.0
        %256 = vmatpush1.msra.mxu0 0.0
        %257 = vmatprep.subr.mxu0 0.0
        %258 = vmatpush1.msra.mxu0 0.0
        %259 = vmatprep.subr.mxu0 0.0
        %260 = vmatpush1.msra.mxu0 0.0
        %261 = vmatprep.subr.mxu0 0.0
        %262 = vmatpush1.msra.mxu0 0.0
        %263 = vmatprep.subr.mxu0 0.0
        %264 = vmatpush1.msra.mxu0 0.0
        %265 = vmatprep.subr.mxu0 0.0
        %266 = vmatpush1.msra.mxu0 0.0
        %267 = vmatprep.subr.mxu0 0.0
        %268 = vmatpush1.msra.mxu0 0.0
        %269 = vmatprep.subr.mxu0 0.0
        %270 = vmatpush1.msra.mxu0 0.0
        %271 = vmatprep.subr.mxu0 0.0
        %272 = vmatpush1.msra.mxu0 %v233
        %273 = vmatprep.subr.mxu0 0.0
        %274 = vmatpush1.msra.mxu0 %v232
        %275 = vmatprep.subr.mxu0 0.0
        %276 = vmatpush1.msra.mxu0 %v231
        %277 = vmatprep.subr.mxu0 0.0
        %278 = vmatpush1.msra.mxu0 %v230
        %279 = vmatprep.subr.mxu0 0.0
        %280 = vmatpush2.msra.mxu0 0.0
        %281 = vmatprep.subr.mxu0 0.0
        %282 = vmatpush2.msra.mxu0 0.0
        %283 = vmatprep.subr.mxu0 0.0
        %284 = vmatpush2.msra.mxu0 0.0
        %285 = vmatprep.subr.mxu0 0.0
        %286 = vmatpush2.msra.mxu0 0.0
        %287 = vmatprep.subr.mxu0 0.0
        %288 = vmatpush2.msra.mxu0 0.0
        %289 = vmatprep.subr.mxu0 0.0
        %290 = vmatpush2.msra.mxu0 0.0
        %291 = vmatprep.subr.mxu0 0.0
        %292 = vmatpush2.msra.mxu0 0.0
        %293 = vmatprep.subr.mxu0 0.0
        %294 = vmatpush2.msra.mxu0 0.0
        %295 = vmatprep.subr.mxu0 0.0
        %296 = vmatpush2.msra.mxu0 0.0
        %297 = vmatprep.subr.mxu0 0.0
        %298 = vmatpush2.msra.mxu0 0.0
        %299 = vmatprep.subr.mxu0 0.0
        %300 = vmatpush2.msra.mxu0 0.0
        %301 = vmatprep.subr.mxu0 0.0
        %302 = vmatpush2.msra.mxu0 0.0
        %303 = vmatprep.subr.mxu0 0.0
        %304 = vmatpush2.msra.mxu0 0.0
        %305 = vmatprep.subr.mxu0 0.0
        %306 = vmatpush2.msra.mxu0 0.0
        %307 = vmatprep.subr.mxu0 0.0
        %308 = vmatpush2.msra.mxu0 0.0
        %309 = vmatprep.subr.mxu0 0.0
        %310 = vmatpush2.msra.mxu0 0.0
        %311 = vmatprep.mubr.f32.mxu0 0.0
        %312 = vmatmul.mubr.f32.gmra.mxu0 %v236
        %v313 = vpop.f32.mrf.mxu0
        %v314 = vadd.f32 0.0, %v313
        %v315 = vpop.f32.mrf.mxu0
        %316 = vmatprep.mubr.f32.mxu0 0.0
        %317 = vmatmul.mubr.f32.gmra.mxu0 %v239
        %v318 = vpop.f32.mrf.mxu0
        %v319 = vadd.f32 0.0, %v318
        %v320 = vpop.f32.mrf.mxu0
        %321 = vmatprep.mubr.f32.mxu0 0.0
        %322 = vmatmul.mubr.f32.gmra.mxu0 %v242
        %v323 = vpop.f32.mrf.mxu0
        %v324 = vadd.f32 0.0, %v323
        %v325 = vpop.f32.mrf.mxu0
        %326 = vmatprep.mubr.f32.mxu0 0.0
        %327 = vmatmul.mubr.f32.gmra.mxu0 %v245
        %v328 = vpop.f32.mrf.mxu0
        %v329 = vadd.f32 0.0, %v328
        %v330 = vpop.f32.mrf.mxu0
        %331 = vdwg.mxu0
        %v332 = vld [vmem:[%s3] sm:$0x1]
        %v333 = vlaneseq
        %v334 = vshrl.u32 %v333, 7
        %v335 = vsub.s32 0, %v334
        %v336 = vrot.slane %v332, %v335
        %v337 = vsub.f32 %v314, %v336
        %v338 = vsub.f32 %v319, %v336
        %v339 = vsub.f32 %v324, %v336
        %v340 = vsub.f32 %v329, %v336
        %v341 = vld [vmem:[%s3 + $0x1] sm:$0x1]
        %v342 = vlaneseq
        %v343 = vshrl.u32 %v342, 7
        %v344 = vsub.s32 0, %v343
        %v345 = vrot.slane %v341, %v344
        %v346 = vmul.f32 %v337, %v345
        %v347 = vmul.f32 %v338, %v345
        %v348 = vmul.f32 %v339, %v345
        %v349 = vmul.f32 %v340, %v345
        %v350 = vmax.f32 %v346, 0.0
        %v351 = vmax.f32 %v347, 0.0
        %v352 = vmax.f32 %v348, 0.0
        %v353 = vmax.f32 %v349, 0.0
        %v354 = vld [vmem:[%s2] sm:$0xff]
        %v355 = vld [vmem:[%s2 + $0x8] sm:$0xff]
        %v356 = vld [vmem:[%s2 + $0x10] sm:$0xff]
        %v357 = vld [vmem:[%s2 + $0x18] sm:$0xff]
        %v359 = vsel %vm234, %v350, 0
        %v362 = vsel %vm234, %v351, 0
        %v365 = vsel %vm234, %v352, 0
        %v368 = vsel %vm234, %v353, 0
        %370 = vmatprep.subr.mxu0 0.0
        %371 = vmatpush1.msra.mxu0 0.0
        %372 = vmatprep.subr.mxu0 0.0
        %373 = vmatpush1.msra.mxu0 0.0
        %374 = vmatprep.subr.mxu0 0.0
        %375 = vmatpush1.msra.mxu0 0.0
        %376 = vmatprep.subr.mxu0 0.0
        %377 = vmatpush1.msra.mxu0 0.0
        %378 = vmatprep.subr.mxu0 0.0
        %379 = vmatpush1.msra.mxu0 0.0
        %380 = vmatprep.subr.mxu0 0.0
        %381 = vmatpush1.msra.mxu0 0.0
        %382 = vmatprep.subr.mxu0 0.0
        %383 = vmatpush1.msra.mxu0 0.0
        %384 = vmatprep.subr.mxu0 0.0
        %385 = vmatpush1.msra.mxu0 0.0
        %386 = vmatprep.subr.mxu0 0.0
        %387 = vmatpush1.msra.mxu0 0.0
        %388 = vmatprep.subr.mxu0 0.0
        %389 = vmatpush1.msra.mxu0 0.0
        %390 = vmatprep.subr.mxu0 0.0
        %391 = vmatpush1.msra.mxu0 0.0
        %392 = vmatprep.subr.mxu0 0.0
        %393 = vmatpush1.msra.mxu0 0.0
        %394 = vmatprep.subr.mxu0 0.0
        %395 = vmatpush1.msra.mxu0 %v357
        %396 = vmatprep.subr.mxu0 0.0
        %397 = vmatpush1.msra.mxu0 %v356
        %398 = vmatprep.subr.mxu0 0.0
        %399 = vmatpush1.msra.mxu0 %v355
        %400 = vmatprep.subr.mxu0 0.0
        %401 = vmatpush1.msra.mxu0 %v354
        %402 = vmatprep.subr.mxu0 0.0
        %403 = vmatpush2.msra.mxu0 0.0
        %404 = vmatprep.subr.mxu0 0.0
        %405 = vmatpush2.msra.mxu0 0.0
        %406 = vmatprep.subr.mxu0 0.0
        %407 = vmatpush2.msra.mxu0 0.0
        %408 = vmatprep.subr.mxu0 0.0
        %409 = vmatpush2.msra.mxu0 0.0
        %410 = vmatprep.subr.mxu0 0.0
        %411 = vmatpush2.msra.mxu0 0.0
        %412 = vmatprep.subr.mxu0 0.0
        %413 = vmatpush2.msra.mxu0 0.0
        %414 = vmatprep.subr.mxu0 0.0
        %415 = vmatpush2.msra.mxu0 0.0
        %416 = vmatprep.subr.mxu0 0.0
        %417 = vmatpush2.msra.mxu0 0.0
        %418 = vmatprep.subr.mxu0 0.0
        %419 = vmatpush2.msra.mxu0 0.0
        %420 = vmatprep.subr.mxu0 0.0
        %421 = vmatpush2.msra.mxu0 0.0
        %422 = vmatprep.subr.mxu0 0.0
        %423 = vmatpush2.msra.mxu0 0.0
        %424 = vmatprep.subr.mxu0 0.0
        %425 = vmatpush2.msra.mxu0 0.0
        %426 = vmatprep.subr.mxu0 0.0
        %427 = vmatpush2.msra.mxu0 0.0
        %428 = vmatprep.subr.mxu0 0.0
        %429 = vmatpush2.msra.mxu0 0.0
        %430 = vmatprep.subr.mxu0 0.0
        %431 = vmatpush2.msra.mxu0 0.0
        %432 = vmatprep.subr.mxu0 0.0
        %433 = vmatpush2.msra.mxu0 0.0
        %434 = vmatprep.mubr.f32.mxu0 0.0
        %435 = vmatmul.mubr.f32.gmra.mxu0 %v359
        %v436 = vpop.f32.mrf.mxu0
        %v437 = vadd.f32 0.0, %v436
        %v438 = vpop.f32.mrf.mxu0
        %439 = vmatprep.mubr.f32.mxu0 0.0
        %440 = vmatmul.mubr.f32.gmra.mxu0 %v362
        %v441 = vpop.f32.mrf.mxu0
        %v442 = vadd.f32 0.0, %v441
        %v443 = vpop.f32.mrf.mxu0
        %444 = vmatprep.mubr.f32.mxu0 0.0
        %445 = vmatmul.mubr.f32.gmra.mxu0 %v365
        %v446 = vpop.f32.mrf.mxu0
        %v447 = vadd.f32 0.0, %v446
        %v448 = vpop.f32.mrf.mxu0
        %449 = vmatprep.mubr.f32.mxu0 0.0
        %450 = vmatmul.mubr.f32.gmra.mxu0 %v368
        %v451 = vpop.f32.mrf.mxu0
        %v452 = vadd.f32 0.0, %v451
        %v453 = vpop.f32.mrf.mxu0
        %454 = vdwg.mxu0
        %v455 = vld [vmem:[%s4] sm:$0x1]
        %v456 = vlaneseq
        %v457 = vshrl.u32 %v456, 7
        %v458 = vsub.s32 0, %v457
        %v459 = vrot.slane %v455, %v458
        %v460 = vsub.f32 %v437, %v459
        %v461 = vsub.f32 %v442, %v459
        %v462 = vsub.f32 %v447, %v459
        %v463 = vsub.f32 %v452, %v459
        %v464 = vld [vmem:[%s4 + $0x1] sm:$0x1]
        %v465 = vlaneseq
        %v466 = vshrl.u32 %v465, 7
        %v467 = vsub.s32 0, %v466
        %v468 = vrot.slane %v464, %v467
        %v469 = vmul.f32 %v460, %v468
        %v470 = vmul.f32 %v461, %v468
        %v471 = vmul.f32 %v462, %v468
        %v472 = vmul.f32 %v463, %v468
        %473 = vst.msk [vmem:[%s218] sm:$0xff] %vm234, %v469
        %474 = vst.msk [vmem:[%s218 + $0x8] sm:$0xff] %vm234, %v470
        %475 = vst.msk [vmem:[%s218 + $0x10] sm:$0xff] %vm234, %v471
        %476 = vst.msk [vmem:[%s218 + $0x18] sm:$0xff] %vm234, %v472
        %s477 = sand.u32 %s137, 1
        %s478 = scalar_lea.sflag [#allocation3], %s477
        %s479 = sand.u32 %s137, 1
        %s480 = smul.addr %s479, 32
        %s481 = scalar_lea.vmem [#allocation2], %s480
        // Predicated region
        $region41: #{st_layer_forward.5} parent=39 // pred_check
          %p482 = pneg %p147
        $region42: #{st_layer_forward.5} parent=39 // pred_check_branch
          %484 = sbr.rel (%p482) target = $region44
        $region43: #{st_layer_forward.5} parent=39 // pred_region
          %s485 = smul.u32 4, %s19
          %s487 = ssub.s32 512, 512
          %488 = vsyncadd %s478, %s487
          %s489 = smul.addr %s485, 128
          %s490 = scalar_lea.hbm %s5, %s489
          %s491 = sshll.u32 %s481, 4
          %s492 = int_to_ptr.vmem [resolvable:$true] %s491
          %497 = dma.vmem_to_hbm [thread:$0]  %s492, 512, %s490, %s478, 128, 128, 8
        $region44: #{st_layer_forward.5} parent=39 // pred_fallthru
          _
      $region40: #{st_layer_forward.5} parent=5 // pred_fallthru
        _
      %p498 = scmp.le.s32.totalorder 2, %s14
      // Predicated region
      $region45: #{st_layer_forward.5} parent=5 // pred_check
        %p499 = pneg %p498
      $region46: #{st_layer_forward.5} parent=5 // pred_check_branch
        %501 = sbr.rel (%p499) target = $region48
      $region47: #{st_layer_forward.5} parent=5 // pred_region
        %s502 = ssub.s32 %s14, 2
        // Predicated region
        $region49: #{st_layer_forward.5} parent=47 // pred_check
          %p503 = pneg %p153
        $region50: #{st_layer_forward.5} parent=47 // pred_check_branch
          %505 = sbr.rel (%p503) target = $region52
        $region51: #{st_layer_forward.5} parent=47 // pred_region
          %s506 = sand.u32 %s138, 1
          %s507 = scalar_lea.sflag [#allocation3], %s506
          %s508 = sand.u32 %s138, 1
          %s509 = smul.addr %s508, 32
          %s510 = scalar_lea.vmem [#allocation2], %s509
          %511 = dma.done %s507, 512
        $region52: #{st_layer_forward.5} parent=47 // pred_fallthru
          _
      $region48: #{st_layer_forward.5} parent=5 // pred_fallthru
        _
    $region6: #{st_layer_forward.5} parent=1 // loop_footer
      %s18 = sadd.s32 1, %s14
    $region7: #{st_layer_forward.5} parent=1 // loop_footer_branch
      %13 = sbr.rel target = $region3
    $region8: #{st_layer_forward.5} parent=1 // loop_exit
      _
    %512 = vsyncpa [#allocation3], 1
    %s513 = scalar_lea.sflag [#allocation3], 1
    %514 = vsyncpa %s513, 1

</llo_original>
